<compile_context>
chip_gen: v6e
topology: v6e:2x2x1
jax: 0.10.0
libtpu: 0.0.40
codegen_flags: <defaults>
</compile_context>

<pallas_src>
import functools

import jax
import jax.numpy as jnp
from jax.experimental import pallas as pl
from jax.experimental.pallas import tpu as pltpu


def _reinforce_kernel(all_params, hidden_size,
                      g0_ref, wstk_ref, bias_ref, wdec_ref, decb_ref,
                      gum_ref, c0_ref,
                      act_ref, logp_ref):
    num_params = len(all_params)
    num_steps = gum_ref.shape[0]
    B = c0_ref.shape[0]
    H = hidden_size
    V = wstk_ref.shape[0] - H
    max_p = decb_ref.shape[2]

    wstk = wstk_ref[...]          # (H+V, 4H) = [W_hh ; emb @ W_ih]   (pre-transposed)
    bias_b = bias_ref[...]        # (B, 4H)   bias_ih + bias_hh, pre-broadcast
    wdec = wdec_ref[...]          # (P, H, max_p)  zero-padded decoder weights
    decb = decb_ref[...]          # (P, B, max_p)  decoder bias + additive -1e30 pad mask
    gum = gum_ref[...]            # (S, B, max_p)  pre-sampled Gumbel noise

    c = c0_ref[...]               # (B, H)

    iota_p = jax.lax.broadcasted_iota(jnp.int32, (B, max_p), 1)
    iota_v = jax.lax.broadcasted_iota(jnp.int32, (B, V), 1)

    h = None
    onehot = None
    acts = []
    logps = []

    for step in range(num_steps):                       # statically unrolled
        param_id = step % num_params

        # ---- nn.LSTMCell pre-activation (PyTorch gate order: i, f, g, o) ----
        if step == 0:
            # x0 @ W_ih + h0 @ W_hh + b is loop-invariant -> precomputed in wrapper.
            gates = g0_ref[...]
        else:
            # one fused MXU push: [h | onehot(action)] @ [W_hh ; emb @ W_ih]
            z = jnp.concatenate([h, onehot], axis=-1)   # (B, H+V)
            gates = jnp.dot(z, wstk, preferred_element_type=jnp.float32) + bias_b

        i_g = jax.nn.sigmoid(gates[:, 0 * H:1 * H])
        f_g = jax.nn.sigmoid(gates[:, 1 * H:2 * H])
        g_g = jnp.tanh(gates[:, 2 * H:3 * H])
        o_g = jax.nn.sigmoid(gates[:, 3 * H:4 * H])
        c = f_g * c + i_g * g_g
        h = o_g * jnp.tanh(c)

        # ---- decoders[param_id] : Linear(H, all_params[param_id]) (padded) ----
        # invalid (padded) lanes already carry -1e30 via decb.
        masked = (jnp.dot(h, wdec[param_id], preferred_element_type=jnp.float32)
                  + decb[param_id])

        # ---- softmax statistics (no full log_softmax materialization) ----
        mx = jnp.max(masked, axis=-1, keepdims=True)
        den = jnp.sum(jnp.exp(masked - mx), axis=-1, keepdims=True)

        # ---- multinomial(num_samples=1) via Gumbel-max on the logits ----
        zg = masked + gum[step]                          # -1e30 lanes cannot win
        zmax = jnp.max(zg, axis=-1, keepdims=True)
        action = jnp.min(jnp.where(zg >= zmax, iota_p, max_p),
                         axis=-1, keepdims=True)         # (B, 1) int32

        # ---- selected log-prob: masked[action] - mx - log(den) ----
        picked = jnp.sum(jnp.where(iota_p == action, masked, 0.0),
                         axis=-1, keepdims=True)         # (B, 1)
        sel = picked - mx - jnp.log(den)

        acts.append(action.astype(jnp.int32))
        logps.append(sel)

        # ---- next input: one-hot(action + offset); embedding folded into wstk ----
        if step + 1 < num_steps:
            # faithful port of `sum(self.all_params[:param_id - 1]) if param_id > 0`
            offset = sum(all_params[:param_id - 1]) if param_id > 0 else 0
            nxt = action + jnp.int32(offset)             # (B, 1)
            onehot = (iota_v == nxt).astype(jnp.float32)  # (B, V)

    # one dense store per output instead of 2*num_steps width-1 column stores
    act_ref[...] = jnp.concatenate(acts, axis=-1)        # (B, S)
    logp_ref[...] = jnp.concatenate(logps, axis=-1)      # (B, S)


def reinforce_forward(inputs0, h0, c0, gumbel,
                      emb, wih, whh, bias, wdec, bdec, mask,
                      all_params, hidden_size):
    B, H = inputs0.shape
    S = gumbel.shape[0]
    P, _, max_p = wdec.shape

    # ---- loop-invariant precomputation (off the in-kernel serial chain) ----
    emb_wih = jnp.dot(emb, wih)                          # (V, 4H): embedding folded into gates
    wstk = jnp.concatenate([whh, emb_wih], axis=0)       # (H+V, 4H) fused gate weight
    bias_b = jnp.broadcast_to(bias, (B, 4 * H))          # hoisted bias broadcast
    g0 = jnp.dot(inputs0, wih) + jnp.dot(h0, whh) + bias  # (B, 4H) step-0 pre-activation
    decb = bdec + (mask - 1.0) * jnp.float32(1e30)       # decoder bias + additive pad mask
    decb_b = jnp.broadcast_to(decb[:, None, :], (P, B, max_p))

    kernel = functools.partial(_reinforce_kernel, tuple(all_params), hidden_size)
    vmem = pl.BlockSpec(memory_space=pltpu.MemorySpace.VMEM)
    acts, logps = pl.pallas_call(
        kernel,
        out_shape=(jax.ShapeDtypeStruct((B, S), jnp.int32),
                   jax.ShapeDtypeStruct((B, S), jnp.float32)),
        in_specs=[vmem] * 7,
        out_specs=(vmem, vmem),
    )(g0, wstk, bias_b, wdec, decb_b, gumbel, c0)

    # torch.cat(actions) concatenates the per-step (B,1) tensors along dim 0
    actions = acts.T.reshape(S * B, 1)
    log_probs = logps.T.reshape(S * B)
    return actions, log_probs


if __name__ == "__main__":
    key = jax.random.PRNGKey(0)

    hidden_size = 32
    all_params = [4, 8, 6]          # decoder output sizes
    num_layers = 2
    B = 2
    V = sum(all_params)
    P = len(all_params)
    max_p = max(all_params)
    num_steps = num_layers * P

    keys = jax.random.split(key, 12)
    bound = float(1.0 / (hidden_size ** 0.5))

    # nn.Embedding(sum(all_params), hidden_size)
    emb = jax.random.normal(keys[0], (V, hidden_size), jnp.float32)

    # nn.LSTMCell(hidden_size, hidden_size)
    w_ih = jax.random.uniform(keys[1], (4 * hidden_size, hidden_size), jnp.float32, -bound, bound)
    w_hh = jax.random.uniform(keys[2], (4 * hidden_size, hidden_size), jnp.float32, -bound, bound)
    b_ih = jax.random.uniform(keys[3], (4 * hidden_size,), jnp.float32, -bound, bound)
    b_hh = jax.random.uniform(keys[4], (4 * hidden_size,), jnp.float32, -bound, bound)
    wih = w_ih.T                                  # (H, 4H)
    whh = w_hh.T                                  # (H, 4H)
    bias = (b_ih + b_hh)[None, :]                 # (1, 4H)

    # nn.ModuleList([nn.Linear(hidden_size, p) for p in all_params]) -> stacked/padded
    wdec = jnp.zeros((P, hidden_size, max_p), jnp.float32)
    bdec = jnp.zeros((P, max_p), jnp.float32)
    mask = jnp.zeros((P, max_p), jnp.float32)
    for pi, p in enumerate(all_params):
        wk, bk = jax.random.split(keys[5 + pi])
        w = jax.random.uniform(wk, (p, hidden_size), jnp.float32, -bound, bound)
        b = jax.random.uniform(bk, (p,), jnp.float32, -bound, bound)
        wdec = wdec.at[pi, :, :p].set(w.T)
        bdec = bdec.at[pi, :p].set(b)
        mask = mask.at[pi, :p].set(1.0)

    # forward(inputs, hidden_states): inputs is (B, hidden) at the very first step
    inputs0 = jax.random.normal(keys[8], (B, hidden_size), jnp.float32)
    h0 = jnp.zeros((B, hidden_size), jnp.float32)
    c0 = jnp.zeros((B, hidden_size), jnp.float32)

    # pre-sampled Gumbel noise drives the categorical sampling deterministically
    gumbel = jax.random.gumbel(keys[9], (num_steps, B, max_p), dtype=jnp.float32)

    actions, log_probs = reinforce_forward(
        inputs0, h0, c0, gumbel, emb, wih, whh, bias, wdec, bdec, mask,
        all_params, hidden_size)
    jax.block_until_ready((actions, log_probs))

    assert actions.shape == (num_steps * B, 1) and actions.dtype == jnp.int32
    assert log_probs.shape == (num_steps * B,) and log_probs.dtype == jnp.float32
    assert bool(jnp.all(actions >= 0))
    assert bool(jnp.all(log_probs <= 0.0))
    print("KERNEL_OK")
</pallas_src>

<mosaic_0001>
module attributes {stable_mosaic.version = 11 : i64} {
  func.func @_reinforce_kernel(%arg0: memref<2x128xf32, #tpu.memory_space<vmem>>, %arg1: memref<50x128xf32, #tpu.memory_space<vmem>>, %arg2: memref<2x128xf32, #tpu.memory_space<vmem>>, %arg3: memref<3x32x8xf32, #tpu.memory_space<vmem>>, %arg4: memref<3x2x8xf32, #tpu.memory_space<vmem>>, %arg5: memref<6x2x8xf32, #tpu.memory_space<vmem>>, %arg6: memref<2x32xf32, #tpu.memory_space<vmem>>, %arg7: memref<2x6xi32, #tpu.memory_space<vmem>>, %arg8: memref<2x6xf32, #tpu.memory_space<vmem>>) attributes {dimension_semantics = [], scalar_prefetch = 0 : i64, scratch_operands = 0 : i64, tpu.core_type = #tpu.core_type<tc>} {
    %c0 = arith.constant 0 : index
    %c0_0 = arith.constant 0 : index
    %0 = vector.load %arg1[%c0, %c0_0] : memref<50x128xf32, #tpu.memory_space<vmem>>, vector<50x128xf32>
    %c0_1 = arith.constant 0 : index
    %c0_2 = arith.constant 0 : index
    %1 = vector.load %arg2[%c0_1, %c0_2] : memref<2x128xf32, #tpu.memory_space<vmem>>, vector<2x128xf32>
    %c0_3 = arith.constant 0 : index
    %c0_4 = arith.constant 0 : index
    %c0_5 = arith.constant 0 : index
    %2 = vector.load %arg3[%c0_3, %c0_4, %c0_5] : memref<3x32x8xf32, #tpu.memory_space<vmem>>, vector<3x32x8xf32>
    %c0_6 = arith.constant 0 : index
    %c0_7 = arith.constant 0 : index
    %c0_8 = arith.constant 0 : index
    %3 = vector.load %arg4[%c0_6, %c0_7, %c0_8] : memref<3x2x8xf32, #tpu.memory_space<vmem>>, vector<3x2x8xf32>
    %c0_9 = arith.constant 0 : index
    %c0_10 = arith.constant 0 : index
    %c0_11 = arith.constant 0 : index
    %4 = vector.load %arg5[%c0_9, %c0_10, %c0_11] : memref<6x2x8xf32, #tpu.memory_space<vmem>>, vector<6x2x8xf32>
    %c0_12 = arith.constant 0 : index
    %c0_13 = arith.constant 0 : index
    %5 = vector.load %arg6[%c0_12, %c0_13] : memref<2x32xf32, #tpu.memory_space<vmem>>, vector<2x32xf32>
    %6 = tpu.iota {dimensions = array<i32: 1>} : vector<2x8xi32>
    %7 = tpu.iota {dimensions = array<i32: 1>} : vector<2x18xi32>
    %c0_14 = arith.constant 0 : index
    %c0_15 = arith.constant 0 : index
    %8 = vector.load %arg0[%c0_14, %c0_15] : memref<2x128xf32, #tpu.memory_space<vmem>>, vector<2x128xf32>
    %9 = vector.extract_strided_slice %8 {offsets = [0, 0], sizes = [2, 32], strides = [1, 1]} : vector<2x128xf32> to vector<2x32xf32>
    %10 = arith.negf %9 : vector<2x32xf32>
    %11 = math.exp %10 : vector<2x32xf32>
    %cst = arith.constant 1.000000e+00 : f32
    %12 = vector.broadcast %cst : f32 to vector<2x32xf32>
    %13 = arith.addf %12, %11 : vector<2x32xf32>
    %14 = arith.divf %12, %13 : vector<2x32xf32>
    %15 = vector.extract_strided_slice %8 {offsets = [0, 32], sizes = [2, 32], strides = [1, 1]} : vector<2x128xf32> to vector<2x32xf32>
    %16 = arith.negf %15 : vector<2x32xf32>
    %17 = math.exp %16 : vector<2x32xf32>
    %cst_16 = arith.constant 1.000000e+00 : f32
    %18 = vector.broadcast %cst_16 : f32 to vector<2x32xf32>
    %19 = arith.addf %18, %17 : vector<2x32xf32>
    %20 = arith.divf %18, %19 : vector<2x32xf32>
    %21 = vector.extract_strided_slice %8 {offsets = [0, 64], sizes = [2, 32], strides = [1, 1]} : vector<2x128xf32> to vector<2x32xf32>
    %22 = math.tanh %21 : vector<2x32xf32>
    %23 = vector.extract_strided_slice %8 {offsets = [0, 96], sizes = [2, 32], strides = [1, 1]} : vector<2x128xf32> to vector<2x32xf32>
    %24 = arith.negf %23 : vector<2x32xf32>
    %25 = math.exp %24 : vector<2x32xf32>
    %cst_17 = arith.constant 1.000000e+00 : f32
    %26 = vector.broadcast %cst_17 : f32 to vector<2x32xf32>
    %27 = arith.addf %26, %25 : vector<2x32xf32>
    %28 = arith.divf %26, %27 : vector<2x32xf32>
    %29 = arith.mulf %20, %5 : vector<2x32xf32>
    %30 = arith.mulf %14, %22 : vector<2x32xf32>
    %31 = arith.addf %29, %30 : vector<2x32xf32>
    %32 = math.tanh %31 : vector<2x32xf32>
    %33 = arith.mulf %28, %32 : vector<2x32xf32>
    %34 = vector.extract_strided_slice %2 {offsets = [0, 0, 0], sizes = [1, 32, 8], strides = [1, 1, 1]} : vector<3x32x8xf32> to vector<1x32x8xf32>
    %35 = vector.shape_cast %34 : vector<1x32x8xf32> to vector<32x8xf32>
    %cst_18 = arith.constant dense<0.000000e+00> : vector<2x8xf32>
    %36 = tpu.matmul %33, %35, %cst_18 {dimension_numbers = #tpu.dot_dimension_numbers<[1], [0], [0], [1], [0, 0, 1, 1], [], []>} : vector<2x32xf32>, vector<32x8xf32>, vector<2x8xf32> -> vector<2x8xf32>
    %37 = vector.extract_strided_slice %3 {offsets = [0, 0, 0], sizes = [1, 2, 8], strides = [1, 1, 1]} : vector<3x2x8xf32> to vector<1x2x8xf32>
    %38 = vector.shape_cast %37 : vector<1x2x8xf32> to vector<2x8xf32>
    %39 = arith.addf %36, %38 : vector<2x8xf32>
    %cst_19 = arith.constant dense<0xFF800000> : vector<2xf32>
    %40 = vector.multi_reduction <maximumf>, %39, %cst_19 [1] : vector<2x8xf32> to vector<2xf32>
    %41 = vector.shape_cast %40 : vector<2xf32> to vector<2x1xf32>
    %42 = vector.broadcast %41 : vector<2x1xf32> to vector<2x8xf32>
    %43 = arith.subf %39, %42 : vector<2x8xf32>
    %44 = math.exp %43 : vector<2x8xf32>
    %cst_20 = arith.constant dense<0.000000e+00> : vector<2xf32>
    %45 = vector.multi_reduction <add>, %44, %cst_20 [1] : vector<2x8xf32> to vector<2xf32>
    %46 = vector.shape_cast %45 : vector<2xf32> to vector<2x1xf32>
    %47 = vector.extract_strided_slice %4 {offsets = [0, 0, 0], sizes = [1, 2, 8], strides = [1, 1, 1]} : vector<6x2x8xf32> to vector<1x2x8xf32>
    %48 = vector.shape_cast %47 : vector<1x2x8xf32> to vector<2x8xf32>
    %49 = arith.addf %39, %48 : vector<2x8xf32>
    %cst_21 = arith.constant dense<0xFF800000> : vector<2xf32>
    %50 = vector.multi_reduction <maximumf>, %49, %cst_21 [1] : vector<2x8xf32> to vector<2xf32>
    %51 = vector.shape_cast %50 : vector<2xf32> to vector<2x1xf32>
    %52 = vector.broadcast %51 : vector<2x1xf32> to vector<2x8xf32>
    %53 = arith.cmpf oge, %49, %52 : vector<2x8xf32>
    %c8_i32 = arith.constant 8 : i32
    %54 = vector.broadcast %c8_i32 : i32 to vector<2x8xi32>
    %55 = arith.select %53, %6, %54 : vector<2x8xi1>, vector<2x8xi32>
    %cst_22 = arith.constant dense<2147483647> : vector<2xi32>
    %56 = vector.multi_reduction <minsi>, %55, %cst_22 [1] : vector<2x8xi32> to vector<2xi32>
    %57 = vector.shape_cast %56 : vector<2xi32> to vector<2x1xi32>
    %58 = vector.broadcast %57 : vector<2x1xi32> to vector<2x8xi32>
    %59 = arith.cmpi eq, %6, %58 : vector<2x8xi32>
    %cst_23 = arith.constant 0.000000e+00 : f32
    %60 = vector.broadcast %cst_23 : f32 to vector<2x8xf32>
    %61 = arith.select %59, %39, %60 : vector<2x8xi1>, vector<2x8xf32>
    %cst_24 = arith.constant dense<0.000000e+00> : vector<2xf32>
    %62 = vector.multi_reduction <add>, %61, %cst_24 [1] : vector<2x8xf32> to vector<2xf32>
    %63 = vector.shape_cast %62 : vector<2xf32> to vector<2x1xf32>
    %64 = arith.subf %63, %41 : vector<2x1xf32>
    %65 = math.log %46 : vector<2x1xf32>
    %66 = arith.subf %64, %65 : vector<2x1xf32>
    %c0_i32 = arith.constant 0 : i32
    %67 = vector.broadcast %c0_i32 : i32 to vector<2x1xi32>
    %68 = arith.addi %57, %67 : vector<2x1xi32>
    %69 = vector.broadcast %68 : vector<2x1xi32> to vector<2x18xi32>
    %70 = arith.cmpi eq, %7, %69 : vector<2x18xi32>
    %71 = arith.extui %70 : vector<2x18xi1> to vector<2x18xi32>
    %72 = arith.sitofp %71 : vector<2x18xi32> to vector<2x18xf32>
    %73 = tpu.concatenate %33, %72 in 1 : vector<2x32xf32>, vector<2x18xf32> -> vector<2x50xf32>
    %cst_25 = arith.constant dense<0.000000e+00> : vector<2x128xf32>
    %74 = tpu.matmul %73, %0, %cst_25 {dimension_numbers = #tpu.dot_dimension_numbers<[1], [0], [0], [1], [0, 0, 1, 1], [], []>} : vector<2x50xf32>, vector<50x128xf32>, vector<2x128xf32> -> vector<2x128xf32>
    %75 = arith.addf %74, %1 : vector<2x128xf32>
    %76 = vector.extract_strided_slice %75 {offsets = [0, 0], sizes = [2, 32], strides = [1, 1]} : vector<2x128xf32> to vector<2x32xf32>
    %77 = arith.negf %76 : vector<2x32xf32>
    %78 = math.exp %77 : vector<2x32xf32>
    %cst_26 = arith.constant 1.000000e+00 : f32
    %79 = vector.broadcast %cst_26 : f32 to vector<2x32xf32>
    %80 = arith.addf %79, %78 : vector<2x32xf32>
    %81 = arith.divf %79, %80 : vector<2x32xf32>
    %82 = vector.extract_strided_slice %75 {offsets = [0, 32], sizes = [2, 32], strides = [1, 1]} : vector<2x128xf32> to vector<2x32xf32>
    %83 = arith.negf %82 : vector<2x32xf32>
    %84 = math.exp %83 : vector<2x32xf32>
    %cst_27 = arith.constant 1.000000e+00 : f32
    %85 = vector.broadcast %cst_27 : f32 to vector<2x32xf32>
    %86 = arith.addf %85, %84 : vector<2x32xf32>
    %87 = arith.divf %85, %86 : vector<2x32xf32>
    %88 = vector.extract_strided_slice %75 {offsets = [0, 64], sizes = [2, 32], strides = [1, 1]} : vector<2x128xf32> to vector<2x32xf32>
    %89 = math.tanh %88 : vector<2x32xf32>
    %90 = vector.extract_strided_slice %75 {offsets = [0, 96], sizes = [2, 32], strides = [1, 1]} : vector<2x128xf32> to vector<2x32xf32>
    %91 = arith.negf %90 : vector<2x32xf32>
    %92 = math.exp %91 : vector<2x32xf32>
    %cst_28 = arith.constant 1.000000e+00 : f32
    %93 = vector.broadcast %cst_28 : f32 to vector<2x32xf32>
    %94 = arith.addf %93, %92 : vector<2x32xf32>
    %95 = arith.divf %93, %94 : vector<2x32xf32>
    %96 = arith.mulf %87, %31 : vector<2x32xf32>
    %97 = arith.mulf %81, %89 : vector<2x32xf32>
    %98 = arith.addf %96, %97 : vector<2x32xf32>
    %99 = math.tanh %98 : vector<2x32xf32>
    %100 = arith.mulf %95, %99 : vector<2x32xf32>
    %101 = vector.extract_strided_slice %2 {offsets = [1, 0, 0], sizes = [1, 32, 8], strides = [1, 1, 1]} : vector<3x32x8xf32> to vector<1x32x8xf32>
    %102 = vector.shape_cast %101 : vector<1x32x8xf32> to vector<32x8xf32>
    %cst_29 = arith.constant dense<0.000000e+00> : vector<2x8xf32>
    %103 = tpu.matmul %100, %102, %cst_29 {dimension_numbers = #tpu.dot_dimension_numbers<[1], [0], [0], [1], [0, 0, 1, 1], [], []>} : vector<2x32xf32>, vector<32x8xf32>, vector<2x8xf32> -> vector<2x8xf32>
    %104 = vector.extract_strided_slice %3 {offsets = [1, 0, 0], sizes = [1, 2, 8], strides = [1, 1, 1]} : vector<3x2x8xf32> to vector<1x2x8xf32>
    %105 = vector.shape_cast %104 : vector<1x2x8xf32> to vector<2x8xf32>
    %106 = arith.addf %103, %105 : vector<2x8xf32>
    %cst_30 = arith.constant dense<0xFF800000> : vector<2xf32>
    %107 = vector.multi_reduction <maximumf>, %106, %cst_30 [1] : vector<2x8xf32> to vector<2xf32>
    %108 = vector.shape_cast %107 : vector<2xf32> to vector<2x1xf32>
    %109 = vector.broadcast %108 : vector<2x1xf32> to vector<2x8xf32>
    %110 = arith.subf %106, %109 : vector<2x8xf32>
    %111 = math.exp %110 : vector<2x8xf32>
    %cst_31 = arith.constant dense<0.000000e+00> : vector<2xf32>
    %112 = vector.multi_reduction <add>, %111, %cst_31 [1] : vector<2x8xf32> to vector<2xf32>
    %113 = vector.shape_cast %112 : vector<2xf32> to vector<2x1xf32>
    %114 = vector.extract_strided_slice %4 {offsets = [1, 0, 0], sizes = [1, 2, 8], strides = [1, 1, 1]} : vector<6x2x8xf32> to vector<1x2x8xf32>
    %115 = vector.shape_cast %114 : vector<1x2x8xf32> to vector<2x8xf32>
    %116 = arith.addf %106, %115 : vector<2x8xf32>
    %cst_32 = arith.constant dense<0xFF800000> : vector<2xf32>
    %117 = vector.multi_reduction <maximumf>, %116, %cst_32 [1] : vector<2x8xf32> to vector<2xf32>
    %118 = vector.shape_cast %117 : vector<2xf32> to vector<2x1xf32>
    %119 = vector.broadcast %118 : vector<2x1xf32> to vector<2x8xf32>
    %120 = arith.cmpf oge, %116, %119 : vector<2x8xf32>
    %c8_i32_33 = arith.constant 8 : i32
    %121 = vector.broadcast %c8_i32_33 : i32 to vector<2x8xi32>
    %122 = arith.select %120, %6, %121 : vector<2x8xi1>, vector<2x8xi32>
    %cst_34 = arith.constant dense<2147483647> : vector<2xi32>
    %123 = vector.multi_reduction <minsi>, %122, %cst_34 [1] : vector<2x8xi32> to vector<2xi32>
    %124 = vector.shape_cast %123 : vector<2xi32> to vector<2x1xi32>
    %125 = vector.broadcast %124 : vector<2x1xi32> to vector<2x8xi32>
    %126 = arith.cmpi eq, %6, %125 : vector<2x8xi32>
    %cst_35 = arith.constant 0.000000e+00 : f32
    %127 = vector.broadcast %cst_35 : f32 to vector<2x8xf32>
    %128 = arith.select %126, %106, %127 : vector<2x8xi1>, vector<2x8xf32>
    %cst_36 = arith.constant dense<0.000000e+00> : vector<2xf32>
    %129 = vector.multi_reduction <add>, %128, %cst_36 [1] : vector<2x8xf32> to vector<2xf32>
    %130 = vector.shape_cast %129 : vector<2xf32> to vector<2x1xf32>
    %131 = arith.subf %130, %108 : vector<2x1xf32>
    %132 = math.log %113 : vector<2x1xf32>
    %133 = arith.subf %131, %132 : vector<2x1xf32>
    %c0_i32_37 = arith.constant 0 : i32
    %134 = vector.broadcast %c0_i32_37 : i32 to vector<2x1xi32>
    %135 = arith.addi %124, %134 : vector<2x1xi32>
    %136 = vector.broadcast %135 : vector<2x1xi32> to vector<2x18xi32>
    %137 = arith.cmpi eq, %7, %136 : vector<2x18xi32>
    %138 = arith.extui %137 : vector<2x18xi1> to vector<2x18xi32>
    %139 = arith.sitofp %138 : vector<2x18xi32> to vector<2x18xf32>
    %140 = tpu.concatenate %100, %139 in 1 : vector<2x32xf32>, vector<2x18xf32> -> vector<2x50xf32>
    %cst_38 = arith.constant dense<0.000000e+00> : vector<2x128xf32>
    %141 = tpu.matmul %140, %0, %cst_38 {dimension_numbers = #tpu.dot_dimension_numbers<[1], [0], [0], [1], [0, 0, 1, 1], [], []>} : vector<2x50xf32>, vector<50x128xf32>, vector<2x128xf32> -> vector<2x128xf32>
    %142 = arith.addf %141, %1 : vector<2x128xf32>
    %143 = vector.extract_strided_slice %142 {offsets = [0, 0], sizes = [2, 32], strides = [1, 1]} : vector<2x128xf32> to vector<2x32xf32>
    %144 = arith.negf %143 : vector<2x32xf32>
    %145 = math.exp %144 : vector<2x32xf32>
    %cst_39 = arith.constant 1.000000e+00 : f32
    %146 = vector.broadcast %cst_39 : f32 to vector<2x32xf32>
    %147 = arith.addf %146, %145 : vector<2x32xf32>
    %148 = arith.divf %146, %147 : vector<2x32xf32>
    %149 = vector.extract_strided_slice %142 {offsets = [0, 32], sizes = [2, 32], strides = [1, 1]} : vector<2x128xf32> to vector<2x32xf32>
    %150 = arith.negf %149 : vector<2x32xf32>
    %151 = math.exp %150 : vector<2x32xf32>
    %cst_40 = arith.constant 1.000000e+00 : f32
    %152 = vector.broadcast %cst_40 : f32 to vector<2x32xf32>
    %153 = arith.addf %152, %151 : vector<2x32xf32>
    %154 = arith.divf %152, %153 : vector<2x32xf32>
    %155 = vector.extract_strided_slice %142 {offsets = [0, 64], sizes = [2, 32], strides = [1, 1]} : vector<2x128xf32> to vector<2x32xf32>
    %156 = math.tanh %155 : vector<2x32xf32>
    %157 = vector.extract_strided_slice %142 {offsets = [0, 96], sizes = [2, 32], strides = [1, 1]} : vector<2x128xf32> to vector<2x32xf32>
    %158 = arith.negf %157 : vector<2x32xf32>
    %159 = math.exp %158 : vector<2x32xf32>
    %cst_41 = arith.constant 1.000000e+00 : f32
    %160 = vector.broadcast %cst_41 : f32 to vector<2x32xf32>
    %161 = arith.addf %160, %159 : vector<2x32xf32>
    %162 = arith.divf %160, %161 : vector<2x32xf32>
    %163 = arith.mulf %154, %98 : vector<2x32xf32>
    %164 = arith.mulf %148, %156 : vector<2x32xf32>
    %165 = arith.addf %163, %164 : vector<2x32xf32>
    %166 = math.tanh %165 : vector<2x32xf32>
    %167 = arith.mulf %162, %166 : vector<2x32xf32>
    %168 = vector.extract_strided_slice %2 {offsets = [2, 0, 0], sizes = [1, 32, 8], strides = [1, 1, 1]} : vector<3x32x8xf32> to vector<1x32x8xf32>
    %169 = vector.shape_cast %168 : vector<1x32x8xf32> to vector<32x8xf32>
    %cst_42 = arith.constant dense<0.000000e+00> : vector<2x8xf32>
    %170 = tpu.matmul %167, %169, %cst_42 {dimension_numbers = #tpu.dot_dimension_numbers<[1], [0], [0], [1], [0, 0, 1, 1], [], []>} : vector<2x32xf32>, vector<32x8xf32>, vector<2x8xf32> -> vector<2x8xf32>
    %171 = vector.extract_strided_slice %3 {offsets = [2, 0, 0], sizes = [1, 2, 8], strides = [1, 1, 1]} : vector<3x2x8xf32> to vector<1x2x8xf32>
    %172 = vector.shape_cast %171 : vector<1x2x8xf32> to vector<2x8xf32>
    %173 = arith.addf %170, %172 : vector<2x8xf32>
    %cst_43 = arith.constant dense<0xFF800000> : vector<2xf32>
    %174 = vector.multi_reduction <maximumf>, %173, %cst_43 [1] : vector<2x8xf32> to vector<2xf32>
    %175 = vector.shape_cast %174 : vector<2xf32> to vector<2x1xf32>
    %176 = vector.broadcast %175 : vector<2x1xf32> to vector<2x8xf32>
    %177 = arith.subf %173, %176 : vector<2x8xf32>
    %178 = math.exp %177 : vector<2x8xf32>
    %cst_44 = arith.constant dense<0.000000e+00> : vector<2xf32>
    %179 = vector.multi_reduction <add>, %178, %cst_44 [1] : vector<2x8xf32> to vector<2xf32>
    %180 = vector.shape_cast %179 : vector<2xf32> to vector<2x1xf32>
    %181 = vector.extract_strided_slice %4 {offsets = [2, 0, 0], sizes = [1, 2, 8], strides = [1, 1, 1]} : vector<6x2x8xf32> to vector<1x2x8xf32>
    %182 = vector.shape_cast %181 : vector<1x2x8xf32> to vector<2x8xf32>
    %183 = arith.addf %173, %182 : vector<2x8xf32>
    %cst_45 = arith.constant dense<0xFF800000> : vector<2xf32>
    %184 = vector.multi_reduction <maximumf>, %183, %cst_45 [1] : vector<2x8xf32> to vector<2xf32>
    %185 = vector.shape_cast %184 : vector<2xf32> to vector<2x1xf32>
    %186 = vector.broadcast %185 : vector<2x1xf32> to vector<2x8xf32>
    %187 = arith.cmpf oge, %183, %186 : vector<2x8xf32>
    %c8_i32_46 = arith.constant 8 : i32
    %188 = vector.broadcast %c8_i32_46 : i32 to vector<2x8xi32>
    %189 = arith.select %187, %6, %188 : vector<2x8xi1>, vector<2x8xi32>
    %cst_47 = arith.constant dense<2147483647> : vector<2xi32>
    %190 = vector.multi_reduction <minsi>, %189, %cst_47 [1] : vector<2x8xi32> to vector<2xi32>
    %191 = vector.shape_cast %190 : vector<2xi32> to vector<2x1xi32>
    %192 = vector.broadcast %191 : vector<2x1xi32> to vector<2x8xi32>
    %193 = arith.cmpi eq, %6, %192 : vector<2x8xi32>
    %cst_48 = arith.constant 0.000000e+00 : f32
    %194 = vector.broadcast %cst_48 : f32 to vector<2x8xf32>
    %195 = arith.select %193, %173, %194 : vector<2x8xi1>, vector<2x8xf32>
    %cst_49 = arith.constant dense<0.000000e+00> : vector<2xf32>
    %196 = vector.multi_reduction <add>, %195, %cst_49 [1] : vector<2x8xf32> to vector<2xf32>
    %197 = vector.shape_cast %196 : vector<2xf32> to vector<2x1xf32>
    %198 = arith.subf %197, %175 : vector<2x1xf32>
    %199 = math.log %180 : vector<2x1xf32>
    %200 = arith.subf %198, %199 : vector<2x1xf32>
    %c4_i32 = arith.constant 4 : i32
    %201 = vector.broadcast %c4_i32 : i32 to vector<2x1xi32>
    %202 = arith.addi %191, %201 : vector<2x1xi32>
    %203 = vector.broadcast %202 : vector<2x1xi32> to vector<2x18xi32>
    %204 = arith.cmpi eq, %7, %203 : vector<2x18xi32>
    %205 = arith.extui %204 : vector<2x18xi1> to vector<2x18xi32>
    %206 = arith.sitofp %205 : vector<2x18xi32> to vector<2x18xf32>
    %207 = tpu.concatenate %167, %206 in 1 : vector<2x32xf32>, vector<2x18xf32> -> vector<2x50xf32>
    %cst_50 = arith.constant dense<0.000000e+00> : vector<2x128xf32>
    %208 = tpu.matmul %207, %0, %cst_50 {dimension_numbers = #tpu.dot_dimension_numbers<[1], [0], [0], [1], [0, 0, 1, 1], [], []>} : vector<2x50xf32>, vector<50x128xf32>, vector<2x128xf32> -> vector<2x128xf32>
    %209 = arith.addf %208, %1 : vector<2x128xf32>
    %210 = vector.extract_strided_slice %209 {offsets = [0, 0], sizes = [2, 32], strides = [1, 1]} : vector<2x128xf32> to vector<2x32xf32>
    %211 = arith.negf %210 : vector<2x32xf32>
    %212 = math.exp %211 : vector<2x32xf32>
    %cst_51 = arith.constant 1.000000e+00 : f32
    %213 = vector.broadcast %cst_51 : f32 to vector<2x32xf32>
    %214 = arith.addf %213, %212 : vector<2x32xf32>
    %215 = arith.divf %213, %214 : vector<2x32xf32>
    %216 = vector.extract_strided_slice %209 {offsets = [0, 32], sizes = [2, 32], strides = [1, 1]} : vector<2x128xf32> to vector<2x32xf32>
    %217 = arith.negf %216 : vector<2x32xf32>
    %218 = math.exp %217 : vector<2x32xf32>
    %cst_52 = arith.constant 1.000000e+00 : f32
    %219 = vector.broadcast %cst_52 : f32 to vector<2x32xf32>
    %220 = arith.addf %219, %218 : vector<2x32xf32>
    %221 = arith.divf %219, %220 : vector<2x32xf32>
    %222 = vector.extract_strided_slice %209 {offsets = [0, 64], sizes = [2, 32], strides = [1, 1]} : vector<2x128xf32> to vector<2x32xf32>
    %223 = math.tanh %222 : vector<2x32xf32>
    %224 = vector.extract_strided_slice %209 {offsets = [0, 96], sizes = [2, 32], strides = [1, 1]} : vector<2x128xf32> to vector<2x32xf32>
    %225 = arith.negf %224 : vector<2x32xf32>
    %226 = math.exp %225 : vector<2x32xf32>
    %cst_53 = arith.constant 1.000000e+00 : f32
    %227 = vector.broadcast %cst_53 : f32 to vector<2x32xf32>
    %228 = arith.addf %227, %226 : vector<2x32xf32>
    %229 = arith.divf %227, %228 : vector<2x32xf32>
    %230 = arith.mulf %221, %165 : vector<2x32xf32>
    %231 = arith.mulf %215, %223 : vector<2x32xf32>
    %232 = arith.addf %230, %231 : vector<2x32xf32>
    %233 = math.tanh %232 : vector<2x32xf32>
    %234 = arith.mulf %229, %233 : vector<2x32xf32>
    %235 = vector.extract_strided_slice %2 {offsets = [0, 0, 0], sizes = [1, 32, 8], strides = [1, 1, 1]} : vector<3x32x8xf32> to vector<1x32x8xf32>
    %236 = vector.shape_cast %235 : vector<1x32x8xf32> to vector<32x8xf32>
    %cst_54 = arith.constant dense<0.000000e+00> : vector<2x8xf32>
    %237 = tpu.matmul %234, %236, %cst_54 {dimension_numbers = #tpu.dot_dimension_numbers<[1], [0], [0], [1], [0, 0, 1, 1], [], []>} : vector<2x32xf32>, vector<32x8xf32>, vector<2x8xf32> -> vector<2x8xf32>
    %238 = vector.extract_strided_slice %3 {offsets = [0, 0, 0], sizes = [1, 2, 8], strides = [1, 1, 1]} : vector<3x2x8xf32> to vector<1x2x8xf32>
    %239 = vector.shape_cast %238 : vector<1x2x8xf32> to vector<2x8xf32>
    %240 = arith.addf %237, %239 : vector<2x8xf32>
    %cst_55 = arith.constant dense<0xFF800000> : vector<2xf32>
    %241 = vector.multi_reduction <maximumf>, %240, %cst_55 [1] : vector<2x8xf32> to vector<2xf32>
    %242 = vector.shape_cast %241 : vector<2xf32> to vector<2x1xf32>
    %243 = vector.broadcast %242 : vector<2x1xf32> to vector<2x8xf32>
    %244 = arith.subf %240, %243 : vector<2x8xf32>
    %245 = math.exp %244 : vector<2x8xf32>
    %cst_56 = arith.constant dense<0.000000e+00> : vector<2xf32>
    %246 = vector.multi_reduction <add>, %245, %cst_56 [1] : vector<2x8xf32> to vector<2xf32>
    %247 = vector.shape_cast %246 : vector<2xf32> to vector<2x1xf32>
    %248 = vector.extract_strided_slice %4 {offsets = [3, 0, 0], sizes = [1, 2, 8], strides = [1, 1, 1]} : vector<6x2x8xf32> to vector<1x2x8xf32>
    %249 = vector.shape_cast %248 : vector<1x2x8xf32> to vector<2x8xf32>
    %250 = arith.addf %240, %249 : vector<2x8xf32>
    %cst_57 = arith.constant dense<0xFF800000> : vector<2xf32>
    %251 = vector.multi_reduction <maximumf>, %250, %cst_57 [1] : vector<2x8xf32> to vector<2xf32>
    %252 = vector.shape_cast %251 : vector<2xf32> to vector<2x1xf32>
    %253 = vector.broadcast %252 : vector<2x1xf32> to vector<2x8xf32>
    %254 = arith.cmpf oge, %250, %253 : vector<2x8xf32>
    %c8_i32_58 = arith.constant 8 : i32
    %255 = vector.broadcast %c8_i32_58 : i32 to vector<2x8xi32>
    %256 = arith.select %254, %6, %255 : vector<2x8xi1>, vector<2x8xi32>
    %cst_59 = arith.constant dense<2147483647> : vector<2xi32>
    %257 = vector.multi_reduction <minsi>, %256, %cst_59 [1] : vector<2x8xi32> to vector<2xi32>
    %258 = vector.shape_cast %257 : vector<2xi32> to vector<2x1xi32>
    %259 = vector.broadcast %258 : vector<2x1xi32> to vector<2x8xi32>
    %260 = arith.cmpi eq, %6, %259 : vector<2x8xi32>
    %cst_60 = arith.constant 0.000000e+00 : f32
    %261 = vector.broadcast %cst_60 : f32 to vector<2x8xf32>
    %262 = arith.select %260, %240, %261 : vector<2x8xi1>, vector<2x8xf32>
    %cst_61 = arith.constant dense<0.000000e+00> : vector<2xf32>
    %263 = vector.multi_reduction <add>, %262, %cst_61 [1] : vector<2x8xf32> to vector<2xf32>
    %264 = vector.shape_cast %263 : vector<2xf32> to vector<2x1xf32>
    %265 = arith.subf %264, %242 : vector<2x1xf32>
    %266 = math.log %247 : vector<2x1xf32>
    %267 = arith.subf %265, %266 : vector<2x1xf32>
    %c0_i32_62 = arith.constant 0 : i32
    %268 = vector.broadcast %c0_i32_62 : i32 to vector<2x1xi32>
    %269 = arith.addi %258, %268 : vector<2x1xi32>
    %270 = vector.broadcast %269 : vector<2x1xi32> to vector<2x18xi32>
    %271 = arith.cmpi eq, %7, %270 : vector<2x18xi32>
    %272 = arith.extui %271 : vector<2x18xi1> to vector<2x18xi32>
    %273 = arith.sitofp %272 : vector<2x18xi32> to vector<2x18xf32>
    %274 = tpu.concatenate %234, %273 in 1 : vector<2x32xf32>, vector<2x18xf32> -> vector<2x50xf32>
    %cst_63 = arith.constant dense<0.000000e+00> : vector<2x128xf32>
    %275 = tpu.matmul %274, %0, %cst_63 {dimension_numbers = #tpu.dot_dimension_numbers<[1], [0], [0], [1], [0, 0, 1, 1], [], []>} : vector<2x50xf32>, vector<50x128xf32>, vector<2x128xf32> -> vector<2x128xf32>
    %276 = arith.addf %275, %1 : vector<2x128xf32>
    %277 = vector.extract_strided_slice %276 {offsets = [0, 0], sizes = [2, 32], strides = [1, 1]} : vector<2x128xf32> to vector<2x32xf32>
    %278 = arith.negf %277 : vector<2x32xf32>
    %279 = math.exp %278 : vector<2x32xf32>
    %cst_64 = arith.constant 1.000000e+00 : f32
    %280 = vector.broadcast %cst_64 : f32 to vector<2x32xf32>
    %281 = arith.addf %280, %279 : vector<2x32xf32>
    %282 = arith.divf %280, %281 : vector<2x32xf32>
    %283 = vector.extract_strided_slice %276 {offsets = [0, 32], sizes = [2, 32], strides = [1, 1]} : vector<2x128xf32> to vector<2x32xf32>
    %284 = arith.negf %283 : vector<2x32xf32>
    %285 = math.exp %284 : vector<2x32xf32>
    %cst_65 = arith.constant 1.000000e+00 : f32
    %286 = vector.broadcast %cst_65 : f32 to vector<2x32xf32>
    %287 = arith.addf %286, %285 : vector<2x32xf32>
    %288 = arith.divf %286, %287 : vector<2x32xf32>
    %289 = vector.extract_strided_slice %276 {offsets = [0, 64], sizes = [2, 32], strides = [1, 1]} : vector<2x128xf32> to vector<2x32xf32>
    %290 = math.tanh %289 : vector<2x32xf32>
    %291 = vector.extract_strided_slice %276 {offsets = [0, 96], sizes = [2, 32], strides = [1, 1]} : vector<2x128xf32> to vector<2x32xf32>
    %292 = arith.negf %291 : vector<2x32xf32>
    %293 = math.exp %292 : vector<2x32xf32>
    %cst_66 = arith.constant 1.000000e+00 : f32
    %294 = vector.broadcast %cst_66 : f32 to vector<2x32xf32>
    %295 = arith.addf %294, %293 : vector<2x32xf32>
    %296 = arith.divf %294, %295 : vector<2x32xf32>
    %297 = arith.mulf %288, %232 : vector<2x32xf32>
    %298 = arith.mulf %282, %290 : vector<2x32xf32>
    %299 = arith.addf %297, %298 : vector<2x32xf32>
    %300 = math.tanh %299 : vector<2x32xf32>
    %301 = arith.mulf %296, %300 : vector<2x32xf32>
    %302 = vector.extract_strided_slice %2 {offsets = [1, 0, 0], sizes = [1, 32, 8], strides = [1, 1, 1]} : vector<3x32x8xf32> to vector<1x32x8xf32>
    %303 = vector.shape_cast %302 : vector<1x32x8xf32> to vector<32x8xf32>
    %cst_67 = arith.constant dense<0.000000e+00> : vector<2x8xf32>
    %304 = tpu.matmul %301, %303, %cst_67 {dimension_numbers = #tpu.dot_dimension_numbers<[1], [0], [0], [1], [0, 0, 1, 1], [], []>} : vector<2x32xf32>, vector<32x8xf32>, vector<2x8xf32> -> vector<2x8xf32>
    %305 = vector.extract_strided_slice %3 {offsets = [1, 0, 0], sizes = [1, 2, 8], strides = [1, 1, 1]} : vector<3x2x8xf32> to vector<1x2x8xf32>
    %306 = vector.shape_cast %305 : vector<1x2x8xf32> to vector<2x8xf32>
    %307 = arith.addf %304, %306 : vector<2x8xf32>
    %cst_68 = arith.constant dense<0xFF800000> : vector<2xf32>
    %308 = vector.multi_reduction <maximumf>, %307, %cst_68 [1] : vector<2x8xf32> to vector<2xf32>
    %309 = vector.shape_cast %308 : vector<2xf32> to vector<2x1xf32>
    %310 = vector.broadcast %309 : vector<2x1xf32> to vector<2x8xf32>
    %311 = arith.subf %307, %310 : vector<2x8xf32>
    %312 = math.exp %311 : vector<2x8xf32>
    %cst_69 = arith.constant dense<0.000000e+00> : vector<2xf32>
    %313 = vector.multi_reduction <add>, %312, %cst_69 [1] : vector<2x8xf32> to vector<2xf32>
    %314 = vector.shape_cast %313 : vector<2xf32> to vector<2x1xf32>
    %315 = vector.extract_strided_slice %4 {offsets = [4, 0, 0], sizes = [1, 2, 8], strides = [1, 1, 1]} : vector<6x2x8xf32> to vector<1x2x8xf32>
    %316 = vector.shape_cast %315 : vector<1x2x8xf32> to vector<2x8xf32>
    %317 = arith.addf %307, %316 : vector<2x8xf32>
    %cst_70 = arith.constant dense<0xFF800000> : vector<2xf32>
    %318 = vector.multi_reduction <maximumf>, %317, %cst_70 [1] : vector<2x8xf32> to vector<2xf32>
    %319 = vector.shape_cast %318 : vector<2xf32> to vector<2x1xf32>
    %320 = vector.broadcast %319 : vector<2x1xf32> to vector<2x8xf32>
    %321 = arith.cmpf oge, %317, %320 : vector<2x8xf32>
    %c8_i32_71 = arith.constant 8 : i32
    %322 = vector.broadcast %c8_i32_71 : i32 to vector<2x8xi32>
    %323 = arith.select %321, %6, %322 : vector<2x8xi1>, vector<2x8xi32>
    %cst_72 = arith.constant dense<2147483647> : vector<2xi32>
    %324 = vector.multi_reduction <minsi>, %323, %cst_72 [1] : vector<2x8xi32> to vector<2xi32>
    %325 = vector.shape_cast %324 : vector<2xi32> to vector<2x1xi32>
    %326 = vector.broadcast %325 : vector<2x1xi32> to vector<2x8xi32>
    %327 = arith.cmpi eq, %6, %326 : vector<2x8xi32>
    %cst_73 = arith.constant 0.000000e+00 : f32
    %328 = vector.broadcast %cst_73 : f32 to vector<2x8xf32>
    %329 = arith.select %327, %307, %328 : vector<2x8xi1>, vector<2x8xf32>
    %cst_74 = arith.constant dense<0.000000e+00> : vector<2xf32>
    %330 = vector.multi_reduction <add>, %329, %cst_74 [1] : vector<2x8xf32> to vector<2xf32>
    %331 = vector.shape_cast %330 : vector<2xf32> to vector<2x1xf32>
    %332 = arith.subf %331, %309 : vector<2x1xf32>
    %333 = math.log %314 : vector<2x1xf32>
    %334 = arith.subf %332, %333 : vector<2x1xf32>
    %c0_i32_75 = arith.constant 0 : i32
    %335 = vector.broadcast %c0_i32_75 : i32 to vector<2x1xi32>
    %336 = arith.addi %325, %335 : vector<2x1xi32>
    %337 = vector.broadcast %336 : vector<2x1xi32> to vector<2x18xi32>
    %338 = arith.cmpi eq, %7, %337 : vector<2x18xi32>
    %339 = arith.extui %338 : vector<2x18xi1> to vector<2x18xi32>
    %340 = arith.sitofp %339 : vector<2x18xi32> to vector<2x18xf32>
    %341 = tpu.concatenate %301, %340 in 1 : vector<2x32xf32>, vector<2x18xf32> -> vector<2x50xf32>
    %cst_76 = arith.constant dense<0.000000e+00> : vector<2x128xf32>
    %342 = tpu.matmul %341, %0, %cst_76 {dimension_numbers = #tpu.dot_dimension_numbers<[1], [0], [0], [1], [0, 0, 1, 1], [], []>} : vector<2x50xf32>, vector<50x128xf32>, vector<2x128xf32> -> vector<2x128xf32>
    %343 = arith.addf %342, %1 : vector<2x128xf32>
    %344 = vector.extract_strided_slice %343 {offsets = [0, 0], sizes = [2, 32], strides = [1, 1]} : vector<2x128xf32> to vector<2x32xf32>
    %345 = arith.negf %344 : vector<2x32xf32>
    %346 = math.exp %345 : vector<2x32xf32>
    %cst_77 = arith.constant 1.000000e+00 : f32
    %347 = vector.broadcast %cst_77 : f32 to vector<2x32xf32>
    %348 = arith.addf %347, %346 : vector<2x32xf32>
    %349 = arith.divf %347, %348 : vector<2x32xf32>
    %350 = vector.extract_strided_slice %343 {offsets = [0, 32], sizes = [2, 32], strides = [1, 1]} : vector<2x128xf32> to vector<2x32xf32>
    %351 = arith.negf %350 : vector<2x32xf32>
    %352 = math.exp %351 : vector<2x32xf32>
    %cst_78 = arith.constant 1.000000e+00 : f32
    %353 = vector.broadcast %cst_78 : f32 to vector<2x32xf32>
    %354 = arith.addf %353, %352 : vector<2x32xf32>
    %355 = arith.divf %353, %354 : vector<2x32xf32>
    %356 = vector.extract_strided_slice %343 {offsets = [0, 64], sizes = [2, 32], strides = [1, 1]} : vector<2x128xf32> to vector<2x32xf32>
    %357 = math.tanh %356 : vector<2x32xf32>
    %358 = vector.extract_strided_slice %343 {offsets = [0, 96], sizes = [2, 32], strides = [1, 1]} : vector<2x128xf32> to vector<2x32xf32>
    %359 = arith.negf %358 : vector<2x32xf32>
    %360 = math.exp %359 : vector<2x32xf32>
    %cst_79 = arith.constant 1.000000e+00 : f32
    %361 = vector.broadcast %cst_79 : f32 to vector<2x32xf32>
    %362 = arith.addf %361, %360 : vector<2x32xf32>
    %363 = arith.divf %361, %362 : vector<2x32xf32>
    %364 = arith.mulf %355, %299 : vector<2x32xf32>
    %365 = arith.mulf %349, %357 : vector<2x32xf32>
    %366 = arith.addf %364, %365 : vector<2x32xf32>
    %367 = math.tanh %366 : vector<2x32xf32>
    %368 = arith.mulf %363, %367 : vector<2x32xf32>
    %369 = vector.extract_strided_slice %2 {offsets = [2, 0, 0], sizes = [1, 32, 8], strides = [1, 1, 1]} : vector<3x32x8xf32> to vector<1x32x8xf32>
    %370 = vector.shape_cast %369 : vector<1x32x8xf32> to vector<32x8xf32>
    %cst_80 = arith.constant dense<0.000000e+00> : vector<2x8xf32>
    %371 = tpu.matmul %368, %370, %cst_80 {dimension_numbers = #tpu.dot_dimension_numbers<[1], [0], [0], [1], [0, 0, 1, 1], [], []>} : vector<2x32xf32>, vector<32x8xf32>, vector<2x8xf32> -> vector<2x8xf32>
    %372 = vector.extract_strided_slice %3 {offsets = [2, 0, 0], sizes = [1, 2, 8], strides = [1, 1, 1]} : vector<3x2x8xf32> to vector<1x2x8xf32>
    %373 = vector.shape_cast %372 : vector<1x2x8xf32> to vector<2x8xf32>
    %374 = arith.addf %371, %373 : vector<2x8xf32>
    %cst_81 = arith.constant dense<0xFF800000> : vector<2xf32>
    %375 = vector.multi_reduction <maximumf>, %374, %cst_81 [1] : vector<2x8xf32> to vector<2xf32>
    %376 = vector.shape_cast %375 : vector<2xf32> to vector<2x1xf32>
    %377 = vector.broadcast %376 : vector<2x1xf32> to vector<2x8xf32>
    %378 = arith.subf %374, %377 : vector<2x8xf32>
    %379 = math.exp %378 : vector<2x8xf32>
    %cst_82 = arith.constant dense<0.000000e+00> : vector<2xf32>
    %380 = vector.multi_reduction <add>, %379, %cst_82 [1] : vector<2x8xf32> to vector<2xf32>
    %381 = vector.shape_cast %380 : vector<2xf32> to vector<2x1xf32>
    %382 = vector.extract_strided_slice %4 {offsets = [5, 0, 0], sizes = [1, 2, 8], strides = [1, 1, 1]} : vector<6x2x8xf32> to vector<1x2x8xf32>
    %383 = vector.shape_cast %382 : vector<1x2x8xf32> to vector<2x8xf32>
    %384 = arith.addf %374, %383 : vector<2x8xf32>
    %cst_83 = arith.constant dense<0xFF800000> : vector<2xf32>
    %385 = vector.multi_reduction <maximumf>, %384, %cst_83 [1] : vector<2x8xf32> to vector<2xf32>
    %386 = vector.shape_cast %385 : vector<2xf32> to vector<2x1xf32>
    %387 = vector.broadcast %386 : vector<2x1xf32> to vector<2x8xf32>
    %388 = arith.cmpf oge, %384, %387 : vector<2x8xf32>
    %c8_i32_84 = arith.constant 8 : i32
    %389 = vector.broadcast %c8_i32_84 : i32 to vector<2x8xi32>
    %390 = arith.select %388, %6, %389 : vector<2x8xi1>, vector<2x8xi32>
    %cst_85 = arith.constant dense<2147483647> : vector<2xi32>
    %391 = vector.multi_reduction <minsi>, %390, %cst_85 [1] : vector<2x8xi32> to vector<2xi32>
    %392 = vector.shape_cast %391 : vector<2xi32> to vector<2x1xi32>
    %393 = vector.broadcast %392 : vector<2x1xi32> to vector<2x8xi32>
    %394 = arith.cmpi eq, %6, %393 : vector<2x8xi32>
    %cst_86 = arith.constant 0.000000e+00 : f32
    %395 = vector.broadcast %cst_86 : f32 to vector<2x8xf32>
    %396 = arith.select %394, %374, %395 : vector<2x8xi1>, vector<2x8xf32>
    %cst_87 = arith.constant dense<0.000000e+00> : vector<2xf32>
    %397 = vector.multi_reduction <add>, %396, %cst_87 [1] : vector<2x8xf32> to vector<2xf32>
    %398 = vector.shape_cast %397 : vector<2xf32> to vector<2x1xf32>
    %399 = arith.subf %398, %376 : vector<2x1xf32>
    %400 = math.log %381 : vector<2x1xf32>
    %401 = arith.subf %399, %400 : vector<2x1xf32>
    %402 = tpu.concatenate %57, %124, %191, %258, %325, %392 in 1 : vector<2x1xi32>, vector<2x1xi32>, vector<2x1xi32>, vector<2x1xi32>, vector<2x1xi32>, vector<2x1xi32> -> vector<2x6xi32>
    %c0_88 = arith.constant 0 : index
    %c0_89 = arith.constant 0 : index
    %403 = vector.load %arg7[%c0_88, %c0_89] : memref<2x6xi32, #tpu.memory_space<vmem>>, vector<2x6xi32>
    tpu.vector_store %arg7[%c0_88, %c0_89], %402 {strides = array<i32>} : memref<2x6xi32, #tpu.memory_space<vmem>>, vector<2x6xi32>,
    %404 = tpu.concatenate %66, %133, %200, %267, %334, %401 in 1 : vector<2x1xf32>, vector<2x1xf32>, vector<2x1xf32>, vector<2x1xf32>, vector<2x1xf32>, vector<2x1xf32> -> vector<2x6xf32>
    %c0_90 = arith.constant 0 : index
    %c0_91 = arith.constant 0 : index
    %405 = vector.load %arg8[%c0_90, %c0_91] : memref<2x6xf32, #tpu.memory_space<vmem>>, vector<2x6xf32>
    tpu.vector_store %arg8[%c0_90, %c0_91], %404 {strides = array<i32>} : memref<2x6xf32, #tpu.memory_space<vmem>>, vector<2x6xf32>,
    return
  }
}

</mosaic_0001>

<llo_original>
// kernel: tpu_custom_call.1
$region0: #{tpu_custom_call.1}
  #allocation0 [shape = 'u32[]', space=smem, size = 0x4, offset = 0x4, fixed_abs, tag = 'smem constant byte address 0x4 - core index']
  #allocation1 [shape = 'u32[144,128]{1,0:T(1,128)}', space=vmem, size = 0x12000, scoped, tag = 'internal scratch']
  %s0 = inlined_call_operand.vmem [shape: f32[2,128], index: 0, kind: input, shape index: {}]
  %s1 = inlined_call_operand.vmem [shape: f32[50,128], index: 1, kind: input, shape index: {}]
  %s2 = inlined_call_operand.vmem [shape: f32[2,128], index: 2, kind: input, shape index: {}]
  %s3 = inlined_call_operand.vmem [shape: f32[3,32,8], index: 3, kind: input, shape index: {}]
  %s4 = inlined_call_operand.vmem [shape: f32[3,2,8], index: 4, kind: input, shape index: {}]
  %s5 = inlined_call_operand.vmem [shape: f32[6,2,8], index: 5, kind: input, shape index: {}]
  %s6 = inlined_call_operand.vmem [shape: f32[2,32], index: 6, kind: input, shape index: {}]
  %s7 = inlined_call_operand.hbm [shape: s32[2,6], index: 7, kind: output, shape index: {0}]
  %s8 = inlined_call_operand.hbm [shape: f32[2,6], index: 8, kind: output, shape index: {1}]
  %9 = xla_tuple %s7, %s8
  %s10 = sld [smem:[#allocation0]]
  $region46: #{tpu_custom_call.1} parent=0
    _
  %s12 = ssub.s32 1, %s10
  %s13 = scalar_select 0, %s12, %s10
  $region1: #{tpu_custom_call.1} parent=0
    #allocation2 [shape = 'u8[1024]{0}', space=vmem, size = 0x400, scoped, tag = 'output window, operand 0, single buffered']
    #allocation3 [shape = 's32[1]{0}', space=sflag, size = 0x4, scoped, tag = 'scoped memory for tpu_custom_call.1']
    #allocation4 [shape = 'u8[1024]{0}', space=vmem, size = 0x400, scoped, tag = 'output window, operand 1, single buffered']
    #allocation5 [shape = 's32[1]{0}', space=sflag, size = 0x4, scoped, tag = 'scoped memory for tpu_custom_call.1']
    %14 = vsyncpa [#allocation3], 0
    %15 = vsyncpa [#allocation5], 0
    // Predicated region
    $region2: #{tpu_custom_call.1} parent=1 // pred_check
      _
    $region3: #{tpu_custom_call.1} parent=1 // pred_check_branch
      %17 = sbr.rel (0) target = $region5
    $region4: #{tpu_custom_call.1} parent=1 // pred_region
      _
    $region5: #{tpu_custom_call.1} parent=1 // pred_fallthru
      _
    // Predicated region
    $region6: #{tpu_custom_call.1} parent=1 // pred_check
      _
    $region7: #{tpu_custom_call.1} parent=1 // pred_check_branch
      %19 = sbr.rel (0) target = $region9
    $region8: #{tpu_custom_call.1} parent=1 // pred_region
      _
    $region9: #{tpu_custom_call.1} parent=1 // pred_fallthru
      _
    // Predicated region
    $region10: #{tpu_custom_call.1} parent=1 // pred_check
      _
    $region11: #{tpu_custom_call.1} parent=1 // pred_check_branch
      %21 = sbr.rel (0) target = $region13
    $region12: #{tpu_custom_call.1} parent=1 // pred_region
      _
    $region13: #{tpu_custom_call.1} parent=1 // pred_fallthru
      _
    // Predicated region
    $region14: #{tpu_custom_call.1} parent=1 // pred_check
      _
    $region15: #{tpu_custom_call.1} parent=1 // pred_check_branch
      %23 = sbr.rel (0) target = $region17
    $region16: #{tpu_custom_call.1} parent=1 // pred_region
      _
    $region17: #{tpu_custom_call.1} parent=1 // pred_fallthru
      _
    // Predicated region
    $region18: #{tpu_custom_call.1} parent=1 // pred_check
      _
    $region19: #{tpu_custom_call.1} parent=1 // pred_check_branch
      %25 = sbr.rel (0) target = $region21
    $region20: #{tpu_custom_call.1} parent=1 // pred_region
      _
    $region21: #{tpu_custom_call.1} parent=1 // pred_fallthru
      _
    // Predicated region
    $region22: #{tpu_custom_call.1} parent=1 // pred_check
      _
    $region23: #{tpu_custom_call.1} parent=1 // pred_check_branch
      %27 = sbr.rel (0) target = $region25
    $region24: #{tpu_custom_call.1} parent=1 // pred_region
      _
    $region25: #{tpu_custom_call.1} parent=1 // pred_fallthru
      _
    // Predicated region
    $region26: #{tpu_custom_call.1} parent=1 // pred_check
      _
    $region27: #{tpu_custom_call.1} parent=1 // pred_check_branch
      %29 = sbr.rel (0) target = $region29
    $region28: #{tpu_custom_call.1} parent=1 // pred_region
      _
    $region29: #{tpu_custom_call.1} parent=1 // pred_fallthru
      _
    %v30 = vld [vmem:[%s1] sm:$0xff]
    %v31 = vld [vmem:[%s1 + $0x8] sm:$0xff]
    %v32 = vld [vmem:[%s1 + $0x10] sm:$0xff]
    %v33 = vld [vmem:[%s1 + $0x18] sm:$0xff]
    %v34 = vld [vmem:[%s1 + $0x20] sm:$0xff]
    %v35 = vld [vmem:[%s1 + $0x28] sm:$0xff]
    %v36 = vld [vmem:[%s1 + $0x30] sm:$0x3]
    %v37 = vld [vmem:[%s2] sm:$0x3]
    %v38 = vld [vmem:[%s3] sm:$0xff]
    %v39 = vld [vmem:[%s3 + $0x8] sm:$0xff]
    %v40 = vld [vmem:[%s3 + $0x10] sm:$0xff]
    %v41 = vld [vmem:[%s3 + $0x18] sm:$0xff]
    %v42 = vld [vmem:[%s3 + $0x20] sm:$0xff]
    %v43 = vld [vmem:[%s3 + $0x28] sm:$0xff]
    %v44 = vld [vmem:[%s3 + $0x30] sm:$0xff]
    %v45 = vld [vmem:[%s3 + $0x38] sm:$0xff]
    %v46 = vld [vmem:[%s3 + $0x40] sm:$0xff]
    %v47 = vld [vmem:[%s3 + $0x48] sm:$0xff]
    %v48 = vld [vmem:[%s3 + $0x50] sm:$0xff]
    %v49 = vld [vmem:[%s3 + $0x58] sm:$0xff]
    %v50 = vld [vmem:[%s4] sm:$0x3]
    %v51 = vld [vmem:[%s4 + $0x2] sm:$0x3]
    %v52 = vld [vmem:[%s4 + $0x4] sm:$0x3]
    %v53 = vld [vmem:[%s5] sm:$0x3]
    %v54 = vld [vmem:[%s5 + $0x2] sm:$0x3]
    %v55 = vld [vmem:[%s5 + $0x4] sm:$0x3]
    %v56 = vld [vmem:[%s5 + $0x6] sm:$0x3]
    %v57 = vld [vmem:[%s5 + $0x8] sm:$0x3]
    %v58 = vld [vmem:[%s5 + $0xa] sm:$0x3]
    %v59 = vld [vmem:[%s6] sm:$0x3]
    %v60 = vlaneseq
    %v61 = vand.u32 %v60, 127
    %v62 = vld [vmem:[%s0] sm:$0x3]
    %v63 = vxor.u32 %v62, 2147483648
    %v64 = vmul.f32 %v63, 1.442695
    %v65 = vpow.pop %v64
    %v66 = vadd.f32 %v65, 1.0
    %v67 = vrcp.pop %v66
    %v68 = vmul.f32 1.0, %v67
    %v69 = vtanh.pop %v62
    %71 = vrot.lane.b32.xlu0 %v59, 32
    %v72 = vpop.permute.xlu0 %71
    %v74 = vmul.f32 %v68, %v72
    %76 = vrot.lane.b32.xlu0 %v69, 64
    %v77 = vpop.permute.xlu0 %76
    %v79 = vmul.f32 %v68, %v77
    %81 = vrot.lane.b32.xlu0 %v79, 32
    %v82 = vpop.permute.xlu0 %81
    %v84 = vadd.f32 %v74, %v82
    %v85 = vtanh.pop %v84
    %87 = vrot.lane.b32.xlu0 %v85, 64
    %v88 = vpop.permute.xlu0 %87
    %v90 = vmul.f32 %v68, %v88
    %92 = vrot.lane.b32.xlu0 %v90, 32
    %v93 = vpop.permute.xlu0 %92
    %vm94 = vcmask 261120
    %v95 = vsel %vm94, %v93, 0
    %97 = vmatprep.subr.mxu0 0.0
    %98 = vmatpush1.msra.mxu0 0.0
    %99 = vmatprep.subr.mxu0 0.0
    %100 = vmatpush1.msra.mxu0 0.0
    %101 = vmatprep.subr.mxu0 0.0
    %102 = vmatpush1.msra.mxu0 0.0
    %103 = vmatprep.subr.mxu0 0.0
    %104 = vmatpush1.msra.mxu0 0.0
    %105 = vmatprep.subr.mxu0 0.0
    %106 = vmatpush1.msra.mxu0 0.0
    %107 = vmatprep.subr.mxu0 0.0
    %108 = vmatpush1.msra.mxu0 0.0
    %109 = vmatprep.subr.mxu0 0.0
    %110 = vmatpush1.msra.mxu0 0.0
    %111 = vmatprep.subr.mxu0 0.0
    %112 = vmatpush1.msra.mxu0 0.0
    %113 = vmatprep.subr.mxu0 0.0
    %114 = vmatpush1.msra.mxu0 0.0
    %115 = vmatprep.subr.mxu0 0.0
    %116 = vmatpush1.msra.mxu0 0.0
    %117 = vmatprep.subr.mxu0 0.0
    %118 = vmatpush1.msra.mxu0 0.0
    %119 = vmatprep.subr.mxu0 0.0
    %120 = vmatpush1.msra.mxu0 0.0
    %121 = vmatprep.subr.mxu0 0.0
    %122 = vmatpush1.msra.mxu0 %v41
    %123 = vmatprep.subr.mxu0 0.0
    %124 = vmatpush1.msra.mxu0 %v40
    %125 = vmatprep.subr.mxu0 0.0
    %126 = vmatpush1.msra.mxu0 %v39
    %127 = vmatprep.subr.mxu0 0.0
    %128 = vmatpush1.msra.mxu0 %v38
    %129 = vmatprep.subr.mxu0 0.0
    %130 = vmatpush2.msra.mxu0 0.0
    %131 = vmatprep.subr.mxu0 0.0
    %132 = vmatpush2.msra.mxu0 0.0
    %133 = vmatprep.subr.mxu0 0.0
    %134 = vmatpush2.msra.mxu0 0.0
    %135 = vmatprep.subr.mxu0 0.0
    %136 = vmatpush2.msra.mxu0 0.0
    %137 = vmatprep.subr.mxu0 0.0
    %138 = vmatpush2.msra.mxu0 0.0
    %139 = vmatprep.subr.mxu0 0.0
    %140 = vmatpush2.msra.mxu0 0.0
    %141 = vmatprep.subr.mxu0 0.0
    %142 = vmatpush2.msra.mxu0 0.0
    %143 = vmatprep.subr.mxu0 0.0
    %144 = vmatpush2.msra.mxu0 0.0
    %145 = vmatprep.subr.mxu0 0.0
    %146 = vmatpush2.msra.mxu0 0.0
    %147 = vmatprep.subr.mxu0 0.0
    %148 = vmatpush2.msra.mxu0 0.0
    %149 = vmatprep.subr.mxu0 0.0
    %150 = vmatpush2.msra.mxu0 0.0
    %151 = vmatprep.subr.mxu0 0.0
    %152 = vmatpush2.msra.mxu0 0.0
    %153 = vmatprep.subr.mxu0 0.0
    %154 = vmatpush2.msra.mxu0 0.0
    %155 = vmatprep.subr.mxu0 0.0
    %156 = vmatpush2.msra.mxu0 0.0
    %157 = vmatprep.subr.mxu0 0.0
    %158 = vmatpush2.msra.mxu0 0.0
    %159 = vmatprep.subr.mxu0 0.0
    %160 = vmatpush2.msra.mxu0 0.0
    %161 = vmatprep.mubr.f32.mxu0 0.0
    %162 = vmatmul.mubr.f32.gmra.mxu0 %v95
    %v163 = vpop.f32.mrf.mxu0
    %v164 = vadd.f32 %v50, %v163
    %v165 = vpop.f32.mrf.mxu0
    %166 = vdwg.mxu0
    %vm167 = vcmask 58368
    %v168 = vsel %vm167, %v164, -inf
    %169 = vmax.xlane.f32.xlu0 %v168
    %v170 = vpop.xlane.xlu0 %169
    %v171 = vsub.f32 %v164, %v170
    %v172 = vmul.f32 %v171, 1.442695
    %v173 = vpow.pop %v172
    %v174 = vsel %vm167, %v173, 0.0
    %175 = vadd.xlane.f32.xlu0 %v174
    %v176 = vpop.xlane.xlu0 %175
    %v177 = vadd.f32 %v164, %v53
    %v178 = vsel %vm167, %v177, -inf
    %179 = vmax.xlane.f32.xlu0 %v178
    %v180 = vpop.xlane.xlu0 %179
    %vm181 = vcmp.ge.f32.partialorder %v177, %v180
    %v182 = vsel %vm181, %v61, 8
    %v183 = vsel %vm167, %v182, 2147483647
    %v184 = vand.u32 %v183, 65535
    %v185 = vshra.s32 %v183, 16
    %v186 = vcvt.s32.f32 %v184
    %v187 = vcvt.s32.f32 %v185
    %188 = vmin.xlane.f32.xlu0 %v187
    %v189 = vpop.xlane.xlu0 %188
    %vm190 = vcmp.eq.f32.partialorder %v187, %v189
    %v191 = vsel %vm190, %v186, inf
    %192 = vmin.xlane.f32.xlu0 %v191
    %v193 = vpop.xlane.xlu0 %192
    %v194 = vcvt.f32.s32 %v193
    %v195 = vcvt.f32.s32 %v189
    %v196 = vshll.u32 %v195, 16
    %v197 = vadd.s32 %v196, %v194
    %vm198 = vcmp.eq.s32.totalorder %v61, %v197
    %v199 = vsel %vm198, %v164, 0.0
    %v200 = vsel %vm167, %v199, 0.0
    %201 = vadd.xlane.f32.xlu0 %v200
    %v202 = vpop.xlane.xlu0 %201
    %v203 = vsub.f32 %v202, %v170
    %v204 = vlog2.pop %v176
    %v205 = vmul.f32 %v204, 0.6931472
    %v206 = vsub.f32 %v203, %v205
    %v207 = vsel %vm198, 1, 0
    %v208 = vcvt.s32.f32 %v207
    %211 = vrot.lane.b32.xlu0 %v208, 32
    %v212 = vpop.permute.xlu0 %211
    %v214 = vsel %vm94, %v93, %v212
    %vm215 = vcmask 408576
    %v217 = vsel %vm215, %v214, 0
    %vm219 = vcmask 1041408
    %v221 = vsel %vm219, %v36, 0
    %223 = vmatprep.subr.mxu0 0.0
    %224 = vmatpush1.msra.mxu0 0.0
    %225 = vmatprep.subr.mxu0 0.0
    %226 = vmatpush1.msra.mxu0 0.0
    %227 = vmatprep.subr.mxu0 0.0
    %228 = vmatpush1.msra.mxu0 0.0
    %229 = vmatprep.subr.mxu0 0.0
    %230 = vmatpush1.msra.mxu0 0.0
    %231 = vmatprep.subr.mxu0 0.0
    %232 = vmatpush1.msra.mxu0 0.0
    %233 = vmatprep.subr.mxu0 0.0
    %234 = vmatpush1.msra.mxu0 0.0
    %235 = vmatprep.subr.mxu0 0.0
    %236 = vmatpush1.msra.mxu0 0.0
    %237 = vmatprep.subr.mxu0 0.0
    %238 = vmatpush1.msra.mxu0 0.0
    %239 = vmatprep.subr.mxu0 0.0
    %240 = vmatpush1.msra.mxu0 0.0
    %241 = vmatprep.subr.mxu0 0.0
    %242 = vmatpush1.msra.mxu0 %v221
    %243 = vmatprep.subr.mxu0 0.0
    %244 = vmatpush1.msra.mxu0 %v35
    %245 = vmatprep.subr.mxu0 0.0
    %246 = vmatpush1.msra.mxu0 %v34
    %247 = vmatprep.subr.mxu0 0.0
    %248 = vmatpush1.msra.mxu0 %v33
    %249 = vmatprep.subr.mxu0 0.0
    %250 = vmatpush1.msra.mxu0 %v32
    %251 = vmatprep.subr.mxu0 0.0
    %252 = vmatpush1.msra.mxu0 %v31
    %253 = vmatprep.subr.mxu0 0.0
    %254 = vmatpush1.msra.mxu0 %v30
    %255 = vmatprep.subr.mxu0 0.0
    %256 = vmatpush2.msra.mxu0 0.0
    %257 = vmatprep.subr.mxu0 0.0
    %258 = vmatpush2.msra.mxu0 0.0
    %259 = vmatprep.subr.mxu0 0.0
    %260 = vmatpush2.msra.mxu0 0.0
    %261 = vmatprep.subr.mxu0 0.0
    %262 = vmatpush2.msra.mxu0 0.0
    %263 = vmatprep.subr.mxu0 0.0
    %264 = vmatpush2.msra.mxu0 0.0
    %265 = vmatprep.subr.mxu0 0.0
    %266 = vmatpush2.msra.mxu0 0.0
    %267 = vmatprep.subr.mxu0 0.0
    %268 = vmatpush2.msra.mxu0 0.0
    %269 = vmatprep.subr.mxu0 0.0
    %270 = vmatpush2.msra.mxu0 0.0
    %271 = vmatprep.subr.mxu0 0.0
    %272 = vmatpush2.msra.mxu0 0.0
    %273 = vmatprep.subr.mxu0 0.0
    %274 = vmatpush2.msra.mxu0 0.0
    %275 = vmatprep.subr.mxu0 0.0
    %276 = vmatpush2.msra.mxu0 0.0
    %277 = vmatprep.subr.mxu0 0.0
    %278 = vmatpush2.msra.mxu0 0.0
    %279 = vmatprep.subr.mxu0 0.0
    %280 = vmatpush2.msra.mxu0 0.0
    %281 = vmatprep.subr.mxu0 0.0
    %282 = vmatpush2.msra.mxu0 0.0
    %283 = vmatprep.subr.mxu0 0.0
    %284 = vmatpush2.msra.mxu0 0.0
    %285 = vmatprep.subr.mxu0 0.0
    %286 = vmatpush2.msra.mxu0 0.0
    %287 = vmatprep.mubr.f32.mxu0 0.0
    %288 = vmatmul.mubr.f32.gmra.mxu0 %v217
    %v289 = vpop.f32.mrf.mxu0
    %v290 = vadd.f32 %v37, %v289
    %v291 = vpop.f32.mrf.mxu0
    %292 = vdwg.mxu0
    %v293 = vxor.u32 %v290, 2147483648
    %v294 = vmul.f32 %v293, 1.442695
    %v295 = vpow.pop %v294
    %v296 = vadd.f32 %v295, 1.0
    %v297 = vrcp.pop %v296
    %v298 = vmul.f32 1.0, %v297
    %v299 = vtanh.pop %v290
    %v300 = vmul.f32 %v298, %v84
    %302 = vrot.lane.b32.xlu0 %v299, 64
    %v303 = vpop.permute.xlu0 %302
    %v305 = vmul.f32 %v298, %v303
    %307 = vrot.lane.b32.xlu0 %v305, 32
    %v308 = vpop.permute.xlu0 %307
    %v310 = vadd.f32 %v300, %v308
    %v311 = vtanh.pop %v310
    %313 = vrot.lane.b32.xlu0 %v311, 64
    %v314 = vpop.permute.xlu0 %313
    %v316 = vmul.f32 %v298, %v314
    %318 = vrot.lane.b32.xlu0 %v316, 32
    %v319 = vpop.permute.xlu0 %318
    %v320 = vsel %vm94, %v319, 0
    %322 = vmatprep.subr.mxu0 0.0
    %323 = vmatpush1.msra.mxu0 0.0
    %324 = vmatprep.subr.mxu0 0.0
    %325 = vmatpush1.msra.mxu0 0.0
    %326 = vmatprep.subr.mxu0 0.0
    %327 = vmatpush1.msra.mxu0 0.0
    %328 = vmatprep.subr.mxu0 0.0
    %329 = vmatpush1.msra.mxu0 0.0
    %330 = vmatprep.subr.mxu0 0.0
    %331 = vmatpush1.msra.mxu0 0.0
    %332 = vmatprep.subr.mxu0 0.0
    %333 = vmatpush1.msra.mxu0 0.0
    %334 = vmatprep.subr.mxu0 0.0
    %335 = vmatpush1.msra.mxu0 0.0
    %336 = vmatprep.subr.mxu0 0.0
    %337 = vmatpush1.msra.mxu0 0.0
    %338 = vmatprep.subr.mxu0 0.0
    %339 = vmatpush1.msra.mxu0 0.0
    %340 = vmatprep.subr.mxu0 0.0
    %341 = vmatpush1.msra.mxu0 0.0
    %342 = vmatprep.subr.mxu0 0.0
    %343 = vmatpush1.msra.mxu0 0.0
    %344 = vmatprep.subr.mxu0 0.0
    %345 = vmatpush1.msra.mxu0 0.0
    %346 = vmatprep.subr.mxu0 0.0
    %347 = vmatpush1.msra.mxu0 %v45
    %348 = vmatprep.subr.mxu0 0.0
    %349 = vmatpush1.msra.mxu0 %v44
    %350 = vmatprep.subr.mxu0 0.0
    %351 = vmatpush1.msra.mxu0 %v43
    %352 = vmatprep.subr.mxu0 0.0
    %353 = vmatpush1.msra.mxu0 %v42
    %354 = vmatprep.subr.mxu0 0.0
    %355 = vmatpush2.msra.mxu0 0.0
    %356 = vmatprep.subr.mxu0 0.0
    %357 = vmatpush2.msra.mxu0 0.0
    %358 = vmatprep.subr.mxu0 0.0
    %359 = vmatpush2.msra.mxu0 0.0
    %360 = vmatprep.subr.mxu0 0.0
    %361 = vmatpush2.msra.mxu0 0.0
    %362 = vmatprep.subr.mxu0 0.0
    %363 = vmatpush2.msra.mxu0 0.0
    %364 = vmatprep.subr.mxu0 0.0
    %365 = vmatpush2.msra.mxu0 0.0
    %366 = vmatprep.subr.mxu0 0.0
    %367 = vmatpush2.msra.mxu0 0.0
    %368 = vmatprep.subr.mxu0 0.0
    %369 = vmatpush2.msra.mxu0 0.0
    %370 = vmatprep.subr.mxu0 0.0
    %371 = vmatpush2.msra.mxu0 0.0
    %372 = vmatprep.subr.mxu0 0.0
    %373 = vmatpush2.msra.mxu0 0.0
    %374 = vmatprep.subr.mxu0 0.0
    %375 = vmatpush2.msra.mxu0 0.0
    %376 = vmatprep.subr.mxu0 0.0
    %377 = vmatpush2.msra.mxu0 0.0
    %378 = vmatprep.subr.mxu0 0.0
    %379 = vmatpush2.msra.mxu0 0.0
    %380 = vmatprep.subr.mxu0 0.0
    %381 = vmatpush2.msra.mxu0 0.0
    %382 = vmatprep.subr.mxu0 0.0
    %383 = vmatpush2.msra.mxu0 0.0
    %384 = vmatprep.subr.mxu0 0.0
    %385 = vmatpush2.msra.mxu0 0.0
    %386 = vmatprep.mubr.f32.mxu0 0.0
    %387 = vmatmul.mubr.f32.gmra.mxu0 %v320
    %v388 = vpop.f32.mrf.mxu0
    %v389 = vadd.f32 %v51, %v388
    %v390 = vpop.f32.mrf.mxu0
    %391 = vdwg.mxu0
    %v392 = vsel %vm167, %v389, -inf
    %393 = vmax.xlane.f32.xlu0 %v392
    %v394 = vpop.xlane.xlu0 %393
    %v395 = vsub.f32 %v389, %v394
    %v396 = vmul.f32 %v395, 1.442695
    %v397 = vpow.pop %v396
    %v398 = vsel %vm167, %v397, 0.0
    %399 = vadd.xlane.f32.xlu0 %v398
    %v400 = vpop.xlane.xlu0 %399
    %v401 = vadd.f32 %v389, %v54
    %v402 = vsel %vm167, %v401, -inf
    %403 = vmax.xlane.f32.xlu0 %v402
    %v404 = vpop.xlane.xlu0 %403
    %vm405 = vcmp.ge.f32.partialorder %v401, %v404
    %v406 = vsel %vm405, %v61, 8
    %v407 = vsel %vm167, %v406, 2147483647
    %v408 = vand.u32 %v407, 65535
    %v409 = vshra.s32 %v407, 16
    %v410 = vcvt.s32.f32 %v408
    %v411 = vcvt.s32.f32 %v409
    %412 = vmin.xlane.f32.xlu0 %v411
    %v413 = vpop.xlane.xlu0 %412
    %vm414 = vcmp.eq.f32.partialorder %v411, %v413
    %v415 = vsel %vm414, %v410, inf
    %416 = vmin.xlane.f32.xlu0 %v415
    %v417 = vpop.xlane.xlu0 %416
    %v418 = vcvt.f32.s32 %v417
    %v419 = vcvt.f32.s32 %v413
    %v420 = vshll.u32 %v419, 16
    %v421 = vadd.s32 %v420, %v418
    %vm422 = vcmp.eq.s32.totalorder %v61, %v421
    %v423 = vsel %vm422, %v389, 0.0
    %v424 = vsel %vm167, %v423, 0.0
    %425 = vadd.xlane.f32.xlu0 %v424
    %v426 = vpop.xlane.xlu0 %425
    %v427 = vsub.f32 %v426, %v394
    %v428 = vlog2.pop %v400
    %v429 = vmul.f32 %v428, 0.6931472
    %v430 = vsub.f32 %v427, %v429
    %v431 = vsel %vm422, 1, 0
    %v432 = vcvt.s32.f32 %v431
    %435 = vrot.lane.b32.xlu0 %v432, 32
    %v436 = vpop.permute.xlu0 %435
    %v438 = vsel %vm94, %v319, %v436
    %v440 = vsel %vm215, %v438, 0
    %442 = vmatprep.subr.mxu0 0.0
    %443 = vmatpush1.msra.mxu0 0.0
    %444 = vmatprep.subr.mxu0 0.0
    %445 = vmatpush1.msra.mxu0 0.0
    %446 = vmatprep.subr.mxu0 0.0
    %447 = vmatpush1.msra.mxu0 0.0
    %448 = vmatprep.subr.mxu0 0.0
    %449 = vmatpush1.msra.mxu0 0.0
    %450 = vmatprep.subr.mxu0 0.0
    %451 = vmatpush1.msra.mxu0 0.0
    %452 = vmatprep.subr.mxu0 0.0
    %453 = vmatpush1.msra.mxu0 0.0
    %454 = vmatprep.subr.mxu0 0.0
    %455 = vmatpush1.msra.mxu0 0.0
    %456 = vmatprep.subr.mxu0 0.0
    %457 = vmatpush1.msra.mxu0 0.0
    %458 = vmatprep.subr.mxu0 0.0
    %459 = vmatpush1.msra.mxu0 0.0
    %460 = vmatprep.subr.mxu0 0.0
    %461 = vmatpush1.msra.mxu0 %v221
    %462 = vmatprep.subr.mxu0 0.0
    %463 = vmatpush1.msra.mxu0 %v35
    %464 = vmatprep.subr.mxu0 0.0
    %465 = vmatpush1.msra.mxu0 %v34
    %466 = vmatprep.subr.mxu0 0.0
    %467 = vmatpush1.msra.mxu0 %v33
    %468 = vmatprep.subr.mxu0 0.0
    %469 = vmatpush1.msra.mxu0 %v32
    %470 = vmatprep.subr.mxu0 0.0
    %471 = vmatpush1.msra.mxu0 %v31
    %472 = vmatprep.subr.mxu0 0.0
    %473 = vmatpush1.msra.mxu0 %v30
    %474 = vmatprep.subr.mxu0 0.0
    %475 = vmatpush2.msra.mxu0 0.0
    %476 = vmatprep.subr.mxu0 0.0
    %477 = vmatpush2.msra.mxu0 0.0
    %478 = vmatprep.subr.mxu0 0.0
    %479 = vmatpush2.msra.mxu0 0.0
    %480 = vmatprep.subr.mxu0 0.0
    %481 = vmatpush2.msra.mxu0 0.0
    %482 = vmatprep.subr.mxu0 0.0
    %483 = vmatpush2.msra.mxu0 0.0
    %484 = vmatprep.subr.mxu0 0.0
    %485 = vmatpush2.msra.mxu0 0.0
    %486 = vmatprep.subr.mxu0 0.0
    %487 = vmatpush2.msra.mxu0 0.0
    %488 = vmatprep.subr.mxu0 0.0
    %489 = vmatpush2.msra.mxu0 0.0
    %490 = vmatprep.subr.mxu0 0.0
    %491 = vmatpush2.msra.mxu0 0.0
    %492 = vmatprep.subr.mxu0 0.0
    %493 = vmatpush2.msra.mxu0 0.0
    %494 = vmatprep.subr.mxu0 0.0
    %495 = vmatpush2.msra.mxu0 0.0
    %496 = vmatprep.subr.mxu0 0.0
    %497 = vmatpush2.msra.mxu0 0.0
    %498 = vmatprep.subr.mxu0 0.0
    %499 = vmatpush2.msra.mxu0 0.0
    %500 = vmatprep.subr.mxu0 0.0
    %501 = vmatpush2.msra.mxu0 0.0
    %502 = vmatprep.subr.mxu0 0.0
    %503 = vmatpush2.msra.mxu0 0.0
    %504 = vmatprep.subr.mxu0 0.0
    %505 = vmatpush2.msra.mxu0 0.0
    %506 = vmatprep.mubr.f32.mxu0 0.0
    %507 = vmatmul.mubr.f32.gmra.mxu0 %v440
    %v508 = vpop.f32.mrf.mxu0
    %v509 = vadd.f32 %v37, %v508
    %v510 = vpop.f32.mrf.mxu0
    %511 = vdwg.mxu0
    %v512 = vxor.u32 %v509, 2147483648
    %v513 = vmul.f32 %v512, 1.442695
    %v514 = vpow.pop %v513
    %v515 = vadd.f32 %v514, 1.0
    %v516 = vrcp.pop %v515
    %v517 = vmul.f32 1.0, %v516
    %v518 = vtanh.pop %v509
    %v519 = vmul.f32 %v517, %v310
    %521 = vrot.lane.b32.xlu0 %v518, 64
    %v522 = vpop.permute.xlu0 %521
    %v524 = vmul.f32 %v517, %v522
    %526 = vrot.lane.b32.xlu0 %v524, 32
    %v527 = vpop.permute.xlu0 %526
    %v529 = vadd.f32 %v519, %v527
    %v530 = vtanh.pop %v529
    %532 = vrot.lane.b32.xlu0 %v530, 64
    %v533 = vpop.permute.xlu0 %532
    %v535 = vmul.f32 %v517, %v533
    %537 = vrot.lane.b32.xlu0 %v535, 32
    %v538 = vpop.permute.xlu0 %537
    %v539 = vsel %vm94, %v538, 0
    %541 = vmatprep.subr.mxu0 0.0
    %542 = vmatpush1.msra.mxu0 0.0
    %543 = vmatprep.subr.mxu0 0.0
    %544 = vmatpush1.msra.mxu0 0.0
    %545 = vmatprep.subr.mxu0 0.0
    %546 = vmatpush1.msra.mxu0 0.0
    %547 = vmatprep.subr.mxu0 0.0
    %548 = vmatpush1.msra.mxu0 0.0
    %549 = vmatprep.subr.mxu0 0.0
    %550 = vmatpush1.msra.mxu0 0.0
    %551 = vmatprep.subr.mxu0 0.0
    %552 = vmatpush1.msra.mxu0 0.0
    %553 = vmatprep.subr.mxu0 0.0
    %554 = vmatpush1.msra.mxu0 0.0
    %555 = vmatprep.subr.mxu0 0.0
    %556 = vmatpush1.msra.mxu0 0.0
    %557 = vmatprep.subr.mxu0 0.0
    %558 = vmatpush1.msra.mxu0 0.0
    %559 = vmatprep.subr.mxu0 0.0
    %560 = vmatpush1.msra.mxu0 0.0
    %561 = vmatprep.subr.mxu0 0.0
    %562 = vmatpush1.msra.mxu0 0.0
    %563 = vmatprep.subr.mxu0 0.0
    %564 = vmatpush1.msra.mxu0 0.0
    %565 = vmatprep.subr.mxu0 0.0
    %566 = vmatpush1.msra.mxu0 %v49
    %567 = vmatprep.subr.mxu0 0.0
    %568 = vmatpush1.msra.mxu0 %v48
    %569 = vmatprep.subr.mxu0 0.0
    %570 = vmatpush1.msra.mxu0 %v47
    %571 = vmatprep.subr.mxu0 0.0
    %572 = vmatpush1.msra.mxu0 %v46
    %573 = vmatprep.subr.mxu0 0.0
    %574 = vmatpush2.msra.mxu0 0.0
    %575 = vmatprep.subr.mxu0 0.0
    %576 = vmatpush2.msra.mxu0 0.0
    %577 = vmatprep.subr.mxu0 0.0
    %578 = vmatpush2.msra.mxu0 0.0
    %579 = vmatprep.subr.mxu0 0.0
    %580 = vmatpush2.msra.mxu0 0.0
    %581 = vmatprep.subr.mxu0 0.0
    %582 = vmatpush2.msra.mxu0 0.0
    %583 = vmatprep.subr.mxu0 0.0
    %584 = vmatpush2.msra.mxu0 0.0
    %585 = vmatprep.subr.mxu0 0.0
    %586 = vmatpush2.msra.mxu0 0.0
    %587 = vmatprep.subr.mxu0 0.0
    %588 = vmatpush2.msra.mxu0 0.0
    %589 = vmatprep.subr.mxu0 0.0
    %590 = vmatpush2.msra.mxu0 0.0
    %591 = vmatprep.subr.mxu0 0.0
    %592 = vmatpush2.msra.mxu0 0.0
    %593 = vmatprep.subr.mxu0 0.0
    %594 = vmatpush2.msra.mxu0 0.0
    %595 = vmatprep.subr.mxu0 0.0
    %596 = vmatpush2.msra.mxu0 0.0
    %597 = vmatprep.subr.mxu0 0.0
    %598 = vmatpush2.msra.mxu0 0.0
    %599 = vmatprep.subr.mxu0 0.0
    %600 = vmatpush2.msra.mxu0 0.0
    %601 = vmatprep.subr.mxu0 0.0
    %602 = vmatpush2.msra.mxu0 0.0
    %603 = vmatprep.subr.mxu0 0.0
    %604 = vmatpush2.msra.mxu0 0.0
    %605 = vmatprep.mubr.f32.mxu0 0.0
    %606 = vmatmul.mubr.f32.gmra.mxu0 %v539
    %v607 = vpop.f32.mrf.mxu0
    %v608 = vadd.f32 %v52, %v607
    %v609 = vpop.f32.mrf.mxu0
    %610 = vdwg.mxu0
    %v611 = vsel %vm167, %v608, -inf
    %612 = vmax.xlane.f32.xlu0 %v611
    %v613 = vpop.xlane.xlu0 %612
    %v614 = vsub.f32 %v608, %v613
    %v615 = vmul.f32 %v614, 1.442695
    %v616 = vpow.pop %v615
    %v617 = vsel %vm167, %v616, 0.0
    %618 = vadd.xlane.f32.xlu0 %v617
    %v619 = vpop.xlane.xlu0 %618
    %v620 = vadd.f32 %v608, %v55
    %v621 = vsel %vm167, %v620, -inf
    %622 = vmax.xlane.f32.xlu0 %v621
    %v623 = vpop.xlane.xlu0 %622
    %vm624 = vcmp.ge.f32.partialorder %v620, %v623
    %v625 = vsel %vm624, %v61, 8
    %v626 = vsel %vm167, %v625, 2147483647
    %v627 = vand.u32 %v626, 65535
    %v628 = vshra.s32 %v626, 16
    %v629 = vcvt.s32.f32 %v627
    %v630 = vcvt.s32.f32 %v628
    %631 = vmin.xlane.f32.xlu0 %v630
    %v632 = vpop.xlane.xlu0 %631
    %vm633 = vcmp.eq.f32.partialorder %v630, %v632
    %v634 = vsel %vm633, %v629, inf
    %635 = vmin.xlane.f32.xlu0 %v634
    %v636 = vpop.xlane.xlu0 %635
    %v637 = vcvt.f32.s32 %v636
    %v638 = vcvt.f32.s32 %v632
    %v639 = vshll.u32 %v638, 16
    %v640 = vadd.s32 %v639, %v637
    %vm641 = vcmp.eq.s32.totalorder %v61, %v640
    %v642 = vsel %vm641, %v608, 0.0
    %v643 = vsel %vm167, %v642, 0.0
    %644 = vadd.xlane.f32.xlu0 %v643
    %v645 = vpop.xlane.xlu0 %644
    %v646 = vsub.f32 %v645, %v613
    %v647 = vlog2.pop %v619
    %v648 = vmul.f32 %v647, 0.6931472
    %v649 = vsub.f32 %v646, %v648
    %v650 = vadd.s32 %v640, 4
    %vm651 = vcmp.eq.s32.totalorder %v61, %v650
    %v652 = vsel %vm651, 1, 0
    %v653 = vcvt.s32.f32 %v652
    %656 = vrot.lane.b32.xlu0 %v653, 32
    %v657 = vpop.permute.xlu0 %656
    %v659 = vsel %vm94, %v538, %v657
    %v661 = vsel %vm215, %v659, 0
    %663 = vmatprep.subr.mxu0 0.0
    %664 = vmatpush1.msra.mxu0 0.0
    %665 = vmatprep.subr.mxu0 0.0
    %666 = vmatpush1.msra.mxu0 0.0
    %667 = vmatprep.subr.mxu0 0.0
    %668 = vmatpush1.msra.mxu0 0.0
    %669 = vmatprep.subr.mxu0 0.0
    %670 = vmatpush1.msra.mxu0 0.0
    %671 = vmatprep.subr.mxu0 0.0
    %672 = vmatpush1.msra.mxu0 0.0
    %673 = vmatprep.subr.mxu0 0.0
    %674 = vmatpush1.msra.mxu0 0.0
    %675 = vmatprep.subr.mxu0 0.0
    %676 = vmatpush1.msra.mxu0 0.0
    %677 = vmatprep.subr.mxu0 0.0
    %678 = vmatpush1.msra.mxu0 0.0
    %679 = vmatprep.subr.mxu0 0.0
    %680 = vmatpush1.msra.mxu0 0.0
    %681 = vmatprep.subr.mxu0 0.0
    %682 = vmatpush1.msra.mxu0 %v221
    %683 = vmatprep.subr.mxu0 0.0
    %684 = vmatpush1.msra.mxu0 %v35
    %685 = vmatprep.subr.mxu0 0.0
    %686 = vmatpush1.msra.mxu0 %v34
    %687 = vmatprep.subr.mxu0 0.0
    %688 = vmatpush1.msra.mxu0 %v33
    %689 = vmatprep.subr.mxu0 0.0
    %690 = vmatpush1.msra.mxu0 %v32
    %691 = vmatprep.subr.mxu0 0.0
    %692 = vmatpush1.msra.mxu0 %v31
    %693 = vmatprep.subr.mxu0 0.0
    %694 = vmatpush1.msra.mxu0 %v30
    %695 = vmatprep.subr.mxu0 0.0
    %696 = vmatpush2.msra.mxu0 0.0
    %697 = vmatprep.subr.mxu0 0.0
    %698 = vmatpush2.msra.mxu0 0.0
    %699 = vmatprep.subr.mxu0 0.0
    %700 = vmatpush2.msra.mxu0 0.0
    %701 = vmatprep.subr.mxu0 0.0
    %702 = vmatpush2.msra.mxu0 0.0
    %703 = vmatprep.subr.mxu0 0.0
    %704 = vmatpush2.msra.mxu0 0.0
    %705 = vmatprep.subr.mxu0 0.0
    %706 = vmatpush2.msra.mxu0 0.0
    %707 = vmatprep.subr.mxu0 0.0
    %708 = vmatpush2.msra.mxu0 0.0
    %709 = vmatprep.subr.mxu0 0.0
    %710 = vmatpush2.msra.mxu0 0.0
    %711 = vmatprep.subr.mxu0 0.0
    %712 = vmatpush2.msra.mxu0 0.0
    %713 = vmatprep.subr.mxu0 0.0
    %714 = vmatpush2.msra.mxu0 0.0
    %715 = vmatprep.subr.mxu0 0.0
    %716 = vmatpush2.msra.mxu0 0.0
    %717 = vmatprep.subr.mxu0 0.0
    %718 = vmatpush2.msra.mxu0 0.0
    %719 = vmatprep.subr.mxu0 0.0
    %720 = vmatpush2.msra.mxu0 0.0
    %721 = vmatprep.subr.mxu0 0.0
    %722 = vmatpush2.msra.mxu0 0.0
    %723 = vmatprep.subr.mxu0 0.0
    %724 = vmatpush2.msra.mxu0 0.0
    %725 = vmatprep.subr.mxu0 0.0
    %726 = vmatpush2.msra.mxu0 0.0
    %727 = vmatprep.mubr.f32.mxu0 0.0
    %728 = vmatmul.mubr.f32.gmra.mxu0 %v661
    %v729 = vpop.f32.mrf.mxu0
    %v730 = vadd.f32 %v37, %v729
    %v731 = vpop.f32.mrf.mxu0
    %732 = vdwg.mxu0
    %v733 = vxor.u32 %v730, 2147483648
    %v734 = vmul.f32 %v733, 1.442695
    %v735 = vpow.pop %v734
    %v736 = vadd.f32 %v735, 1.0
    %v737 = vrcp.pop %v736
    %v738 = vmul.f32 1.0, %v737
    %v739 = vtanh.pop %v730
    %v740 = vmul.f32 %v738, %v529
    %742 = vrot.lane.b32.xlu0 %v739, 64
    %v743 = vpop.permute.xlu0 %742
    %v745 = vmul.f32 %v738, %v743
    %747 = vrot.lane.b32.xlu0 %v745, 32
    %v748 = vpop.permute.xlu0 %747
    %v750 = vadd.f32 %v740, %v748
    %v751 = vtanh.pop %v750
    %753 = vrot.lane.b32.xlu0 %v751, 64
    %v754 = vpop.permute.xlu0 %753
    %v756 = vmul.f32 %v738, %v754
    %758 = vrot.lane.b32.xlu0 %v756, 32
    %v759 = vpop.permute.xlu0 %758
    %v760 = vsel %vm94, %v759, 0
    %762 = vmatprep.subr.mxu0 0.0
    %763 = vmatpush1.msra.mxu0 0.0
    %764 = vmatprep.subr.mxu0 0.0
    %765 = vmatpush1.msra.mxu0 0.0
    %766 = vmatprep.subr.mxu0 0.0
    %767 = vmatpush1.msra.mxu0 0.0
    %768 = vmatprep.subr.mxu0 0.0
    %769 = vmatpush1.msra.mxu0 0.0
    %770 = vmatprep.subr.mxu0 0.0
    %771 = vmatpush1.msra.mxu0 0.0
    %772 = vmatprep.subr.mxu0 0.0
    %773 = vmatpush1.msra.mxu0 0.0
    %774 = vmatprep.subr.mxu0 0.0
    %775 = vmatpush1.msra.mxu0 0.0
    %776 = vmatprep.subr.mxu0 0.0
    %777 = vmatpush1.msra.mxu0 0.0
    %778 = vmatprep.subr.mxu0 0.0
    %779 = vmatpush1.msra.mxu0 0.0
    %780 = vmatprep.subr.mxu0 0.0
    %781 = vmatpush1.msra.mxu0 0.0
    %782 = vmatprep.subr.mxu0 0.0
    %783 = vmatpush1.msra.mxu0 0.0
    %784 = vmatprep.subr.mxu0 0.0
    %785 = vmatpush1.msra.mxu0 0.0
    %786 = vmatprep.subr.mxu0 0.0
    %787 = vmatpush1.msra.mxu0 %v41
    %788 = vmatprep.subr.mxu0 0.0
    %789 = vmatpush1.msra.mxu0 %v40
    %790 = vmatprep.subr.mxu0 0.0
    %791 = vmatpush1.msra.mxu0 %v39
    %792 = vmatprep.subr.mxu0 0.0
    %793 = vmatpush1.msra.mxu0 %v38
    %794 = vmatprep.subr.mxu0 0.0
    %795 = vmatpush2.msra.mxu0 0.0
    %796 = vmatprep.subr.mxu0 0.0
    %797 = vmatpush2.msra.mxu0 0.0
    %798 = vmatprep.subr.mxu0 0.0
    %799 = vmatpush2.msra.mxu0 0.0
    %800 = vmatprep.subr.mxu0 0.0
    %801 = vmatpush2.msra.mxu0 0.0
    %802 = vmatprep.subr.mxu0 0.0
    %803 = vmatpush2.msra.mxu0 0.0
    %804 = vmatprep.subr.mxu0 0.0
    %805 = vmatpush2.msra.mxu0 0.0
    %806 = vmatprep.subr.mxu0 0.0
    %807 = vmatpush2.msra.mxu0 0.0
    %808 = vmatprep.subr.mxu0 0.0
    %809 = vmatpush2.msra.mxu0 0.0
    %810 = vmatprep.subr.mxu0 0.0
    %811 = vmatpush2.msra.mxu0 0.0
    %812 = vmatprep.subr.mxu0 0.0
    %813 = vmatpush2.msra.mxu0 0.0
    %814 = vmatprep.subr.mxu0 0.0
    %815 = vmatpush2.msra.mxu0 0.0
    %816 = vmatprep.subr.mxu0 0.0
    %817 = vmatpush2.msra.mxu0 0.0
    %818 = vmatprep.subr.mxu0 0.0
    %819 = vmatpush2.msra.mxu0 0.0
    %820 = vmatprep.subr.mxu0 0.0
    %821 = vmatpush2.msra.mxu0 0.0
    %822 = vmatprep.subr.mxu0 0.0
    %823 = vmatpush2.msra.mxu0 0.0
    %824 = vmatprep.subr.mxu0 0.0
    %825 = vmatpush2.msra.mxu0 0.0
    %826 = vmatprep.mubr.f32.mxu0 0.0
    %827 = vmatmul.mubr.f32.gmra.mxu0 %v760
    %v828 = vpop.f32.mrf.mxu0
    %v829 = vadd.f32 %v50, %v828
    %v830 = vpop.f32.mrf.mxu0
    %831 = vdwg.mxu0
    %v832 = vsel %vm167, %v829, -inf
    %833 = vmax.xlane.f32.xlu0 %v832
    %v834 = vpop.xlane.xlu0 %833
    %v835 = vsub.f32 %v829, %v834
    %v836 = vmul.f32 %v835, 1.442695
    %v837 = vpow.pop %v836
    %v838 = vsel %vm167, %v837, 0.0
    %839 = vadd.xlane.f32.xlu0 %v838
    %v840 = vpop.xlane.xlu0 %839
    %v841 = vadd.f32 %v829, %v56
    %v842 = vsel %vm167, %v841, -inf
    %843 = vmax.xlane.f32.xlu0 %v842
    %v844 = vpop.xlane.xlu0 %843
    %vm845 = vcmp.ge.f32.partialorder %v841, %v844
    %v846 = vsel %vm845, %v61, 8
    %v847 = vsel %vm167, %v846, 2147483647
    %v848 = vand.u32 %v847, 65535
    %v849 = vshra.s32 %v847, 16
    %v850 = vcvt.s32.f32 %v848
    %v851 = vcvt.s32.f32 %v849
    %852 = vmin.xlane.f32.xlu0 %v851
    %v853 = vpop.xlane.xlu0 %852
    %vm854 = vcmp.eq.f32.partialorder %v851, %v853
    %v855 = vsel %vm854, %v850, inf
    %856 = vmin.xlane.f32.xlu0 %v855
    %v857 = vpop.xlane.xlu0 %856
    %v858 = vcvt.f32.s32 %v857
    %v859 = vcvt.f32.s32 %v853
    %v860 = vshll.u32 %v859, 16
    %v861 = vadd.s32 %v860, %v858
    %vm862 = vcmp.eq.s32.totalorder %v61, %v861
    %v863 = vsel %vm862, %v829, 0.0
    %v864 = vsel %vm167, %v863, 0.0
    %865 = vadd.xlane.f32.xlu0 %v864
    %v866 = vpop.xlane.xlu0 %865
    %v867 = vsub.f32 %v866, %v834
    %v868 = vlog2.pop %v840
    %v869 = vmul.f32 %v868, 0.6931472
    %v870 = vsub.f32 %v867, %v869
    %v871 = vsel %vm862, 1, 0
    %v872 = vcvt.s32.f32 %v871
    %875 = vrot.lane.b32.xlu0 %v872, 32
    %v876 = vpop.permute.xlu0 %875
    %v878 = vsel %vm94, %v759, %v876
    %v880 = vsel %vm215, %v878, 0
    %882 = vmatprep.subr.mxu0 0.0
    %883 = vmatpush1.msra.mxu0 0.0
    %884 = vmatprep.subr.mxu0 0.0
    %885 = vmatpush1.msra.mxu0 0.0
    %886 = vmatprep.subr.mxu0 0.0
    %887 = vmatpush1.msra.mxu0 0.0
    %888 = vmatprep.subr.mxu0 0.0
    %889 = vmatpush1.msra.mxu0 0.0
    %890 = vmatprep.subr.mxu0 0.0
    %891 = vmatpush1.msra.mxu0 0.0
    %892 = vmatprep.subr.mxu0 0.0
    %893 = vmatpush1.msra.mxu0 0.0
    %894 = vmatprep.subr.mxu0 0.0
    %895 = vmatpush1.msra.mxu0 0.0
    %896 = vmatprep.subr.mxu0 0.0
    %897 = vmatpush1.msra.mxu0 0.0
    %898 = vmatprep.subr.mxu0 0.0
    %899 = vmatpush1.msra.mxu0 0.0
    %900 = vmatprep.subr.mxu0 0.0
    %901 = vmatpush1.msra.mxu0 %v221
    %902 = vmatprep.subr.mxu0 0.0
    %903 = vmatpush1.msra.mxu0 %v35
    %904 = vmatprep.subr.mxu0 0.0
    %905 = vmatpush1.msra.mxu0 %v34
    %906 = vmatprep.subr.mxu0 0.0
    %907 = vmatpush1.msra.mxu0 %v33
    %908 = vmatprep.subr.mxu0 0.0
    %909 = vmatpush1.msra.mxu0 %v32
    %910 = vmatprep.subr.mxu0 0.0
    %911 = vmatpush1.msra.mxu0 %v31
    %912 = vmatprep.subr.mxu0 0.0
    %913 = vmatpush1.msra.mxu0 %v30
    %914 = vmatprep.subr.mxu0 0.0
    %915 = vmatpush2.msra.mxu0 0.0
    %916 = vmatprep.subr.mxu0 0.0
    %917 = vmatpush2.msra.mxu0 0.0
    %918 = vmatprep.subr.mxu0 0.0
    %919 = vmatpush2.msra.mxu0 0.0
    %920 = vmatprep.subr.mxu0 0.0
    %921 = vmatpush2.msra.mxu0 0.0
    %922 = vmatprep.subr.mxu0 0.0
    %923 = vmatpush2.msra.mxu0 0.0
    %924 = vmatprep.subr.mxu0 0.0
    %925 = vmatpush2.msra.mxu0 0.0
    %926 = vmatprep.subr.mxu0 0.0
    %927 = vmatpush2.msra.mxu0 0.0
    %928 = vmatprep.subr.mxu0 0.0
    %929 = vmatpush2.msra.mxu0 0.0
    %930 = vmatprep.subr.mxu0 0.0
    %931 = vmatpush2.msra.mxu0 0.0
    %932 = vmatprep.subr.mxu0 0.0
    %933 = vmatpush2.msra.mxu0 0.0
    %934 = vmatprep.subr.mxu0 0.0
    %935 = vmatpush2.msra.mxu0 0.0
    %936 = vmatprep.subr.mxu0 0.0
    %937 = vmatpush2.msra.mxu0 0.0
    %938 = vmatprep.subr.mxu0 0.0
    %939 = vmatpush2.msra.mxu0 0.0
    %940 = vmatprep.subr.mxu0 0.0
    %941 = vmatpush2.msra.mxu0 0.0
    %942 = vmatprep.subr.mxu0 0.0
    %943 = vmatpush2.msra.mxu0 0.0
    %944 = vmatprep.subr.mxu0 0.0
    %945 = vmatpush2.msra.mxu0 0.0
    %946 = vmatprep.mubr.f32.mxu0 0.0
    %947 = vmatmul.mubr.f32.gmra.mxu0 %v880
    %v948 = vpop.f32.mrf.mxu0
    %v949 = vadd.f32 %v37, %v948
    %v950 = vpop.f32.mrf.mxu0
    %951 = vdwg.mxu0
    %v952 = vxor.u32 %v949, 2147483648
    %v953 = vmul.f32 %v952, 1.442695
    %v954 = vpow.pop %v953
    %v955 = vadd.f32 %v954, 1.0
    %v956 = vrcp.pop %v955
    %v957 = vmul.f32 1.0, %v956
    %v958 = vtanh.pop %v949
    %v959 = vmul.f32 %v957, %v750
    %961 = vrot.lane.b32.xlu0 %v958, 64
    %v962 = vpop.permute.xlu0 %961
    %v964 = vmul.f32 %v957, %v962
    %966 = vrot.lane.b32.xlu0 %v964, 32
    %v967 = vpop.permute.xlu0 %966
    %v969 = vadd.f32 %v959, %v967
    %v970 = vtanh.pop %v969
    %972 = vrot.lane.b32.xlu0 %v970, 64
    %v973 = vpop.permute.xlu0 %972
    %v975 = vmul.f32 %v957, %v973
    %977 = vrot.lane.b32.xlu0 %v975, 32
    %v978 = vpop.permute.xlu0 %977
    %v979 = vsel %vm94, %v978, 0
    %981 = vmatprep.subr.mxu0 0.0
    %982 = vmatpush1.msra.mxu0 0.0
    %983 = vmatprep.subr.mxu0 0.0
    %984 = vmatpush1.msra.mxu0 0.0
    %985 = vmatprep.subr.mxu0 0.0
    %986 = vmatpush1.msra.mxu0 0.0
    %987 = vmatprep.subr.mxu0 0.0
    %988 = vmatpush1.msra.mxu0 0.0
    %989 = vmatprep.subr.mxu0 0.0
    %990 = vmatpush1.msra.mxu0 0.0
    %991 = vmatprep.subr.mxu0 0.0
    %992 = vmatpush1.msra.mxu0 0.0
    %993 = vmatprep.subr.mxu0 0.0
    %994 = vmatpush1.msra.mxu0 0.0
    %995 = vmatprep.subr.mxu0 0.0
    %996 = vmatpush1.msra.mxu0 0.0
    %997 = vmatprep.subr.mxu0 0.0
    %998 = vmatpush1.msra.mxu0 0.0
    %999 = vmatprep.subr.mxu0 0.0
    %1000 = vmatpush1.msra.mxu0 0.0
    %1001 = vmatprep.subr.mxu0 0.0
    %1002 = vmatpush1.msra.mxu0 0.0
    %1003 = vmatprep.subr.mxu0 0.0
    %1004 = vmatpush1.msra.mxu0 0.0
    %1005 = vmatprep.subr.mxu0 0.0
    %1006 = vmatpush1.msra.mxu0 %v45
    %1007 = vmatprep.subr.mxu0 0.0
    %1008 = vmatpush1.msra.mxu0 %v44
    %1009 = vmatprep.subr.mxu0 0.0
    %1010 = vmatpush1.msra.mxu0 %v43
    %1011 = vmatprep.subr.mxu0 0.0
    %1012 = vmatpush1.msra.mxu0 %v42
    %1013 = vmatprep.subr.mxu0 0.0
    %1014 = vmatpush2.msra.mxu0 0.0
    %1015 = vmatprep.subr.mxu0 0.0
    %1016 = vmatpush2.msra.mxu0 0.0
    %1017 = vmatprep.subr.mxu0 0.0
    %1018 = vmatpush2.msra.mxu0 0.0
    %1019 = vmatprep.subr.mxu0 0.0
    %1020 = vmatpush2.msra.mxu0 0.0
    %1021 = vmatprep.subr.mxu0 0.0
    %1022 = vmatpush2.msra.mxu0 0.0
    %1023 = vmatprep.subr.mxu0 0.0
    %1024 = vmatpush2.msra.mxu0 0.0
    %1025 = vmatprep.subr.mxu0 0.0
    %1026 = vmatpush2.msra.mxu0 0.0
    %1027 = vmatprep.subr.mxu0 0.0
    %1028 = vmatpush2.msra.mxu0 0.0
    %1029 = vmatprep.subr.mxu0 0.0
    %1030 = vmatpush2.msra.mxu0 0.0
    %1031 = vmatprep.subr.mxu0 0.0
    %1032 = vmatpush2.msra.mxu0 0.0
    %1033 = vmatprep.subr.mxu0 0.0
    %1034 = vmatpush2.msra.mxu0 0.0
    %1035 = vmatprep.subr.mxu0 0.0
    %1036 = vmatpush2.msra.mxu0 0.0
    %1037 = vmatprep.subr.mxu0 0.0
    %1038 = vmatpush2.msra.mxu0 0.0
    %1039 = vmatprep.subr.mxu0 0.0
    %1040 = vmatpush2.msra.mxu0 0.0
    %1041 = vmatprep.subr.mxu0 0.0
    %1042 = vmatpush2.msra.mxu0 0.0
    %1043 = vmatprep.subr.mxu0 0.0
    %1044 = vmatpush2.msra.mxu0 0.0
    %1045 = vmatprep.mubr.f32.mxu0 0.0
    %1046 = vmatmul.mubr.f32.gmra.mxu0 %v979
    %v1047 = vpop.f32.mrf.mxu0
    %v1048 = vadd.f32 %v51, %v1047
    %v1049 = vpop.f32.mrf.mxu0
    %1050 = vdwg.mxu0
    %v1051 = vsel %vm167, %v1048, -inf
    %1052 = vmax.xlane.f32.xlu0 %v1051
    %v1053 = vpop.xlane.xlu0 %1052
    %v1054 = vsub.f32 %v1048, %v1053
    %v1055 = vmul.f32 %v1054, 1.442695
    %v1056 = vpow.pop %v1055
    %v1057 = vsel %vm167, %v1056, 0.0
    %1058 = vadd.xlane.f32.xlu0 %v1057
    %v1059 = vpop.xlane.xlu0 %1058
    %v1060 = vadd.f32 %v1048, %v57
    %v1061 = vsel %vm167, %v1060, -inf
    %1062 = vmax.xlane.f32.xlu0 %v1061
    %v1063 = vpop.xlane.xlu0 %1062
    %vm1064 = vcmp.ge.f32.partialorder %v1060, %v1063
    %v1065 = vsel %vm1064, %v61, 8
    %v1066 = vsel %vm167, %v1065, 2147483647
    %v1067 = vand.u32 %v1066, 65535
    %v1068 = vshra.s32 %v1066, 16
    %v1069 = vcvt.s32.f32 %v1067
    %v1070 = vcvt.s32.f32 %v1068
    %1071 = vmin.xlane.f32.xlu0 %v1070
    %v1072 = vpop.xlane.xlu0 %1071
    %vm1073 = vcmp.eq.f32.partialorder %v1070, %v1072
    %v1074 = vsel %vm1073, %v1069, inf
    %1075 = vmin.xlane.f32.xlu0 %v1074
    %v1076 = vpop.xlane.xlu0 %1075
    %v1077 = vcvt.f32.s32 %v1076
    %v1078 = vcvt.f32.s32 %v1072
    %v1079 = vshll.u32 %v1078, 16
    %v1080 = vadd.s32 %v1079, %v1077
    %vm1081 = vcmp.eq.s32.totalorder %v61, %v1080
    %v1082 = vsel %vm1081, %v1048, 0.0
    %v1083 = vsel %vm167, %v1082, 0.0
    %1084 = vadd.xlane.f32.xlu0 %v1083
    %v1085 = vpop.xlane.xlu0 %1084
    %v1086 = vsub.f32 %v1085, %v1053
    %v1087 = vlog2.pop %v1059
    %v1088 = vmul.f32 %v1087, 0.6931472
    %v1089 = vsub.f32 %v1086, %v1088
    %v1090 = vsel %vm1081, 1, 0
    %v1091 = vcvt.s32.f32 %v1090
    %1094 = vrot.lane.b32.xlu0 %v1091, 32
    %v1095 = vpop.permute.xlu0 %1094
    %v1097 = vsel %vm94, %v978, %v1095
    %v1099 = vsel %vm215, %v1097, 0
    %1101 = vmatprep.subr.mxu0 0.0
    %1102 = vmatpush1.msra.mxu0 0.0
    %1103 = vmatprep.subr.mxu0 0.0
    %1104 = vmatpush1.msra.mxu0 0.0
    %1105 = vmatprep.subr.mxu0 0.0
    %1106 = vmatpush1.msra.mxu0 0.0
    %1107 = vmatprep.subr.mxu0 0.0
    %1108 = vmatpush1.msra.mxu0 0.0
    %1109 = vmatprep.subr.mxu0 0.0
    %1110 = vmatpush1.msra.mxu0 0.0
    %1111 = vmatprep.subr.mxu0 0.0
    %1112 = vmatpush1.msra.mxu0 0.0
    %1113 = vmatprep.subr.mxu0 0.0
    %1114 = vmatpush1.msra.mxu0 0.0
    %1115 = vmatprep.subr.mxu0 0.0
    %1116 = vmatpush1.msra.mxu0 0.0
    %1117 = vmatprep.subr.mxu0 0.0
    %1118 = vmatpush1.msra.mxu0 0.0
    %1119 = vmatprep.subr.mxu0 0.0
    %1120 = vmatpush1.msra.mxu0 %v221
    %1121 = vmatprep.subr.mxu0 0.0
    %1122 = vmatpush1.msra.mxu0 %v35
    %1123 = vmatprep.subr.mxu0 0.0
    %1124 = vmatpush1.msra.mxu0 %v34
    %1125 = vmatprep.subr.mxu0 0.0
    %1126 = vmatpush1.msra.mxu0 %v33
    %1127 = vmatprep.subr.mxu0 0.0
    %1128 = vmatpush1.msra.mxu0 %v32
    %1129 = vmatprep.subr.mxu0 0.0
    %1130 = vmatpush1.msra.mxu0 %v31
    %1131 = vmatprep.subr.mxu0 0.0
    %1132 = vmatpush1.msra.mxu0 %v30
    %1133 = vmatprep.subr.mxu0 0.0
    %1134 = vmatpush2.msra.mxu0 0.0
    %1135 = vmatprep.subr.mxu0 0.0
    %1136 = vmatpush2.msra.mxu0 0.0
    %1137 = vmatprep.subr.mxu0 0.0
    %1138 = vmatpush2.msra.mxu0 0.0
    %1139 = vmatprep.subr.mxu0 0.0
    %1140 = vmatpush2.msra.mxu0 0.0
    %1141 = vmatprep.subr.mxu0 0.0
    %1142 = vmatpush2.msra.mxu0 0.0
    %1143 = vmatprep.subr.mxu0 0.0
    %1144 = vmatpush2.msra.mxu0 0.0
    %1145 = vmatprep.subr.mxu0 0.0
    %1146 = vmatpush2.msra.mxu0 0.0
    %1147 = vmatprep.subr.mxu0 0.0
    %1148 = vmatpush2.msra.mxu0 0.0
    %1149 = vmatprep.subr.mxu0 0.0
    %1150 = vmatpush2.msra.mxu0 0.0
    %1151 = vmatprep.subr.mxu0 0.0
    %1152 = vmatpush2.msra.mxu0 0.0
    %1153 = vmatprep.subr.mxu0 0.0
    %1154 = vmatpush2.msra.mxu0 0.0
    %1155 = vmatprep.subr.mxu0 0.0
    %1156 = vmatpush2.msra.mxu0 0.0
    %1157 = vmatprep.subr.mxu0 0.0
    %1158 = vmatpush2.msra.mxu0 0.0
    %1159 = vmatprep.subr.mxu0 0.0
    %1160 = vmatpush2.msra.mxu0 0.0
    %1161 = vmatprep.subr.mxu0 0.0
    %1162 = vmatpush2.msra.mxu0 0.0
    %1163 = vmatprep.subr.mxu0 0.0
    %1164 = vmatpush2.msra.mxu0 0.0
    %1165 = vmatprep.mubr.f32.mxu0 0.0
    %1166 = vmatmul.mubr.f32.gmra.mxu0 %v1099
    %v1167 = vpop.f32.mrf.mxu0
    %v1168 = vadd.f32 %v37, %v1167
    %v1169 = vpop.f32.mrf.mxu0
    %1170 = vdwg.mxu0
    %v1171 = vxor.u32 %v1168, 2147483648
    %v1172 = vmul.f32 %v1171, 1.442695
    %v1173 = vpow.pop %v1172
    %v1174 = vadd.f32 %v1173, 1.0
    %v1175 = vrcp.pop %v1174
    %v1176 = vmul.f32 1.0, %v1175
    %v1177 = vtanh.pop %v1168
    %v1178 = vmul.f32 %v1176, %v969
    %1180 = vrot.lane.b32.xlu0 %v1177, 64
    %v1181 = vpop.permute.xlu0 %1180
    %v1183 = vmul.f32 %v1176, %v1181
    %1185 = vrot.lane.b32.xlu0 %v1183, 32
    %v1186 = vpop.permute.xlu0 %1185
    %v1188 = vadd.f32 %v1178, %v1186
    %v1189 = vtanh.pop %v1188
    %1191 = vrot.lane.b32.xlu0 %v1189, 64
    %v1192 = vpop.permute.xlu0 %1191
    %v1194 = vmul.f32 %v1176, %v1192
    %1196 = vrot.lane.b32.xlu0 %v1194, 32
    %v1197 = vpop.permute.xlu0 %1196
    %v1198 = vsel %vm94, %v1197, 0
    %1200 = vmatprep.subr.mxu0 0.0
    %1201 = vmatpush1.msra.mxu0 0.0
    %1202 = vmatprep.subr.mxu0 0.0
    %1203 = vmatpush1.msra.mxu0 0.0
    %1204 = vmatprep.subr.mxu0 0.0
    %1205 = vmatpush1.msra.mxu0 0.0
    %1206 = vmatprep.subr.mxu0 0.0
    %1207 = vmatpush1.msra.mxu0 0.0
    %1208 = vmatprep.subr.mxu0 0.0
    %1209 = vmatpush1.msra.mxu0 0.0
    %1210 = vmatprep.subr.mxu0 0.0
    %1211 = vmatpush1.msra.mxu0 0.0
    %1212 = vmatprep.subr.mxu0 0.0
    %1213 = vmatpush1.msra.mxu0 0.0
    %1214 = vmatprep.subr.mxu0 0.0
    %1215 = vmatpush1.msra.mxu0 0.0
    %1216 = vmatprep.subr.mxu0 0.0
    %1217 = vmatpush1.msra.mxu0 0.0
    %1218 = vmatprep.subr.mxu0 0.0
    %1219 = vmatpush1.msra.mxu0 0.0
    %1220 = vmatprep.subr.mxu0 0.0
    %1221 = vmatpush1.msra.mxu0 0.0
    %1222 = vmatprep.subr.mxu0 0.0
    %1223 = vmatpush1.msra.mxu0 0.0
    %1224 = vmatprep.subr.mxu0 0.0
    %1225 = vmatpush1.msra.mxu0 %v49
    %1226 = vmatprep.subr.mxu0 0.0
    %1227 = vmatpush1.msra.mxu0 %v48
    %1228 = vmatprep.subr.mxu0 0.0
    %1229 = vmatpush1.msra.mxu0 %v47
    %1230 = vmatprep.subr.mxu0 0.0
    %1231 = vmatpush1.msra.mxu0 %v46
    %1232 = vmatprep.subr.mxu0 0.0
    %1233 = vmatpush2.msra.mxu0 0.0
    %1234 = vmatprep.subr.mxu0 0.0
    %1235 = vmatpush2.msra.mxu0 0.0
    %1236 = vmatprep.subr.mxu0 0.0
    %1237 = vmatpush2.msra.mxu0 0.0
    %1238 = vmatprep.subr.mxu0 0.0
    %1239 = vmatpush2.msra.mxu0 0.0
    %1240 = vmatprep.subr.mxu0 0.0
    %1241 = vmatpush2.msra.mxu0 0.0
    %1242 = vmatprep.subr.mxu0 0.0
    %1243 = vmatpush2.msra.mxu0 0.0
    %1244 = vmatprep.subr.mxu0 0.0
    %1245 = vmatpush2.msra.mxu0 0.0
    %1246 = vmatprep.subr.mxu0 0.0
    %1247 = vmatpush2.msra.mxu0 0.0
    %1248 = vmatprep.subr.mxu0 0.0
    %1249 = vmatpush2.msra.mxu0 0.0
    %1250 = vmatprep.subr.mxu0 0.0
    %1251 = vmatpush2.msra.mxu0 0.0
    %1252 = vmatprep.subr.mxu0 0.0
    %1253 = vmatpush2.msra.mxu0 0.0
    %1254 = vmatprep.subr.mxu0 0.0
    %1255 = vmatpush2.msra.mxu0 0.0
    %1256 = vmatprep.subr.mxu0 0.0
    %1257 = vmatpush2.msra.mxu0 0.0
    %1258 = vmatprep.subr.mxu0 0.0
    %1259 = vmatpush2.msra.mxu0 0.0
    %1260 = vmatprep.subr.mxu0 0.0
    %1261 = vmatpush2.msra.mxu0 0.0
    %1262 = vmatprep.subr.mxu0 0.0
    %1263 = vmatpush2.msra.mxu0 0.0
    %1264 = vmatprep.mubr.f32.mxu0 0.0
    %1265 = vmatmul.mubr.f32.gmra.mxu0 %v1198
    %v1266 = vpop.f32.mrf.mxu0
    %v1267 = vadd.f32 %v52, %v1266
    %v1268 = vpop.f32.mrf.mxu0
    %1269 = vdwg.mxu0
    %v1270 = vsel %vm167, %v1267, -inf
    %1271 = vmax.xlane.f32.xlu0 %v1270
    %v1272 = vpop.xlane.xlu0 %1271
    %v1273 = vsub.f32 %v1267, %v1272
    %v1274 = vmul.f32 %v1273, 1.442695
    %v1275 = vpow.pop %v1274
    %v1276 = vsel %vm167, %v1275, 0.0
    %1277 = vadd.xlane.f32.xlu0 %v1276
    %v1278 = vpop.xlane.xlu0 %1277
    %v1279 = vadd.f32 %v1267, %v58
    %v1280 = vsel %vm167, %v1279, -inf
    %1281 = vmax.xlane.f32.xlu0 %v1280
    %v1282 = vpop.xlane.xlu0 %1281
    %vm1283 = vcmp.ge.f32.partialorder %v1279, %v1282
    %v1284 = vsel %vm1283, %v61, 8
    %v1285 = vsel %vm167, %v1284, 2147483647
    %v1286 = vand.u32 %v1285, 65535
    %v1287 = vshra.s32 %v1285, 16
    %v1288 = vcvt.s32.f32 %v1286
    %v1289 = vcvt.s32.f32 %v1287
    %1290 = vmin.xlane.f32.xlu0 %v1289
    %v1291 = vpop.xlane.xlu0 %1290
    %vm1292 = vcmp.eq.f32.partialorder %v1289, %v1291
    %v1293 = vsel %vm1292, %v1288, inf
    %1294 = vmin.xlane.f32.xlu0 %v1293
    %v1295 = vpop.xlane.xlu0 %1294
    %v1296 = vcvt.f32.s32 %v1295
    %v1297 = vcvt.f32.s32 %v1291
    %v1298 = vshll.u32 %v1297, 16
    %v1299 = vadd.s32 %v1298, %v1296
    %vm1300 = vcmp.eq.s32.totalorder %v61, %v1299
    %v1301 = vsel %vm1300, %v1267, 0.0
    %v1302 = vsel %vm167, %v1301, 0.0
    %1303 = vadd.xlane.f32.xlu0 %v1302
    %v1304 = vpop.xlane.xlu0 %1303
    %v1305 = vsub.f32 %v1304, %v1272
    %v1306 = vlog2.pop %v1278
    %v1307 = vmul.f32 %v1306, 0.6931472
    %v1308 = vsub.f32 %v1305, %v1307
    %vm1309 = vcmask 7168
    %v1310 = vsel %vm1309, %v197, %v421
    %vm1311 = vcmask 15360
    %v1312 = vsel %vm1311, %v1310, %v640
    %vm1313 = vcmask 23552
    %v1314 = vsel %vm1313, %v1312, %v861
    %vm1315 = vcmask 31744
    %v1316 = vsel %vm1315, %v1314, %v1080
    %vm1317 = vcmask 39936
    %v1318 = vsel %vm1317, %v1316, %v1299
    %vm1319 = vcmask 41984
    %1320 = vst.msk [vmem:[#allocation2] sm:$0x3] %vm1319, %v1318
    %v1321 = vsel %vm1309, %v206, %v430
    %v1322 = vsel %vm1311, %v1321, %v649
    %v1323 = vsel %vm1313, %v1322, %v870
    %v1324 = vsel %vm1315, %v1323, %v1089
    %v1325 = vsel %vm1317, %v1324, %v1308
    %1326 = vst.msk [vmem:[#allocation4] sm:$0x3] %vm1319, %v1325
    // Predicated region
    $region30: #{tpu_custom_call.1} parent=1 // pred_check
      _
    $region31: #{tpu_custom_call.1} parent=1 // pred_check_branch
      %1328 = sbr.rel (0) target = $region33
    $region32: #{tpu_custom_call.1} parent=1 // pred_region
      %s1330 = ssub.s32 32, 32
      %1331 = vsyncadd [#allocation3], %s1330
      %s1333 = sshll.u32 [#allocation2], 4
      %s1334 = int_to_ptr.vmem [resolvable:$true] %s1333
      %1336 = dma.vmem_to_hbm [thread:$0]  %s1334, 32, %s7, [#allocation3]
    $region33: #{tpu_custom_call.1} parent=1 // pred_fallthru
      _
    // Predicated region
    $region34: #{tpu_custom_call.1} parent=1 // pred_check
      _
    $region35: #{tpu_custom_call.1} parent=1 // pred_check_branch
      %1338 = sbr.rel (0) target = $region37
    $region36: #{tpu_custom_call.1} parent=1 // pred_region
      %s1340 = ssub.s32 32, 32
      %1341 = vsyncadd [#allocation5], %s1340
      %s1343 = sshll.u32 [#allocation4], 4
      %s1344 = int_to_ptr.vmem [resolvable:$true] %s1343
      %1346 = dma.vmem_to_hbm [thread:$0]  %s1344, 32, %s8, [#allocation5]
    $region37: #{tpu_custom_call.1} parent=1 // pred_fallthru
      _
    // Predicated region
    $region38: #{tpu_custom_call.1} parent=1 // pred_check
      _
    $region39: #{tpu_custom_call.1} parent=1 // pred_check_branch
      %1348 = sbr.rel (0) target = $region41
    $region40: #{tpu_custom_call.1} parent=1 // pred_region
      %1349 = dma.done [#allocation3], 32
    $region41: #{tpu_custom_call.1} parent=1 // pred_fallthru
      _
    // Predicated region
    $region42: #{tpu_custom_call.1} parent=1 // pred_check
      _
    $region43: #{tpu_custom_call.1} parent=1 // pred_check_branch
      %1351 = sbr.rel (0) target = $region45
    $region44: #{tpu_custom_call.1} parent=1 // pred_region
      %1352 = dma.done [#allocation5], 32
    $region45: #{tpu_custom_call.1} parent=1 // pred_fallthru
      _
    %1353 = vsyncpa [#allocation3], 1
    %1354 = vsyncpa [#allocation5], 1

</llo_original>
